<compile_context>
chip_gen: v5e
topology: v5e:2x2
jax: 0.10.0
libtpu: 0.0.40
codegen_flags: <defaults>
</compile_context>

<pallas_src>
import numpy as np
import jax
import jax.numpy as jnp
from jax import lax
from jax.experimental import pallas as pl
from jax.experimental.pallas import tpu as pltpu

# ----------------------------- configuration -----------------------------
F_E, F_X, F_U, F_OUT = 6, 8, 8, 4       # f_dict features
H = 32                                  # mlp_layers = [32]
N_ITERS = 2                             # AlternatingDouble N
N_GRAPHS = 2
NODES_PER_GRAPH = 8
EDGES_PER_GRAPH = 16
N_NODES = N_GRAPHS * NODES_PER_GRAPH
N_EDGES = N_GRAPHS * EDGES_PER_GRAPH

LANE = 128
def pad8(n): return (n + 7) // 8 * 8
DE, DX, DU = pad8(F_E), pad8(F_X), pad8(F_U)    # storage widths of e / x / u

# Every MLP's first Linear is decomposed per concat operand (split-concat matmul).
MLP_SPECS = []
for g in ('g1', 'g2'):
    MLP_SPECS.append((f'{g}_edge',
                      [('xs', F_X), ('xd', F_X), ('e', F_E), ('ua', F_U), ('ub', F_U)],
                      F_E))
    MLP_SPECS.append((f'{g}_node',
                      [('x', F_X), ('ea', F_E), ('ua', F_U), ('ub', F_U)],
                      F_X))
    MLP_SPECS.append((f'{g}_glob',
                      [('xa', F_X), ('ua', F_U), ('ub', F_U)],
                      F_U))
MLP_SPECS.append(('out', [('u1', F_U), ('u2', F_U)], F_OUT))


# ---------------- parameter init (torch.nn.Linear style) + packing ----------------
def init_params(key):
    """Pack all weights into one bf16 [R,128] slab and all biases into one f32 slab."""
    w_blocks, w_offs, row = [], {}, 0
    b_rows_list, b_rows = [], {}

    def add_w(name, mat, in_true, out_true):
        nonlocal row
        rpad = pad8(in_true)
        blk = np.zeros((rpad, LANE), np.float32)
        blk[:in_true, :out_true] = mat
        w_blocks.append(blk)
        w_offs[name] = (row, rpad)
        row += rpad

    def add_b(name, vec, out_true):
        r = np.zeros((LANE,), np.float32)
        r[:out_true] = vec
        b_rows[name] = len(b_rows_list)
        b_rows_list.append(r)

    for name, ops, f_out in MLP_SPECS:
        fan_in = sum(d for _, d in ops)
        key, k0w, k0b, k1w, k1b = jax.random.split(key, 5)
        bnd0, bnd1 = 1.0 / np.sqrt(fan_in), 1.0 / np.sqrt(H)
        W0 = np.asarray(jax.random.uniform(k0w, (fan_in, H), jnp.float32, -bnd0, bnd0))
        b0 = np.asarray(jax.random.uniform(k0b, (H,), jnp.float32, -bnd0, bnd0))
        W1 = np.asarray(jax.random.uniform(k1w, (H, f_out), jnp.float32, -bnd1, bnd1))
        b1 = np.asarray(jax.random.uniform(k1b, (f_out,), jnp.float32, -bnd1, bnd1))
        r = 0
        for op, d in ops:                       # split first layer by concat operand
            add_w(f'{name}/W0/{op}', W0[r:r + d], d, H)
            r += d
        add_w(f'{name}/W1', W1, H, f_out)
        add_b(f'{name}/b0', b0, H)
        add_b(f'{name}/b1', b1, f_out)

    w_slab = jnp.asarray(np.concatenate(w_blocks, 0), jnp.bfloat16)
    nb = pad8(len(b_rows_list))
    b_np = np.zeros((nb, LANE), np.float32)
    b_np[:len(b_rows_list)] = np.stack(b_rows_list, 0)
    b_slab = jnp.asarray(b_np)
    return w_slab, b_slab, w_offs, b_rows, key


# ------------------------------- Pallas kernel -------------------------------
def make_kernel(w_offs, b_rows):
    bf16, f32 = jnp.bfloat16, jnp.float32

    def dotf(a, b):
        return jnp.dot(a, b, preferred_element_type=f32)

    def dot_t(a, b):
        # a^T @ b without materializing a.T: contract axis 0 of both operands.
        return lax.dot_general(a, b, (((0,), (0,)), ((), ())),
                               preferred_element_type=f32)

    def kernel(x1_ref, e1_ref, u1_ref, x2_ref, e2_ref, u2_ref,
               s1s_ref, s1d_ref, a1_ref, s2s_ref, s2d_ref, a2_ref,
               w_ref, b_ref, y_ref):
        # ---- hoist ALL parameter loads out of the iteration loop (loaded once) ----
        Ws = {n: w_ref[off:off + rp, :] for n, (off, rp) in w_offs.items()}
        b_all = b_ref[...]
        Bs = {n: b_all[r:r + 1, :] for n, r in b_rows.items()}

        def mlp_tail(name, pre, out_w):
            h = jnp.maximum(pre, 0.0)[:, :H].astype(bf16)
            o = dotf(h, Ws[f'{name}/W1']) + Bs[f'{name}/b1']
            return o[:, :out_w]

        def gnn(pfx, x, e, ua, ub, Ss, Sd, A):
            nm_e, nm_x, nm_u = f'{pfx}_edge', f'{pfx}_node', f'{pfx}_glob'
            # EdgeModel: phi_e([x_src, x_dst, e, u[batch_src]]); u/x projections done
            # at graph/node level first, then gathered to edges (reassociation).
            ug = dotf(ua, Ws[f'{nm_e}/W0/ua']) + dotf(ub, Ws[f'{nm_e}/W0/ub'])  # [g,128]
            un = dotf(A, ug.astype(bf16))                                        # [n,128]
            xs = dotf(x, Ws[f'{nm_e}/W0/xs'])                                    # [n,128]
            xd = dotf(x, Ws[f'{nm_e}/W0/xd'])                                    # [n,128]
            pre_e = (dotf(Ss, (xs + un).astype(bf16))
                     + dotf(Sd, xd.astype(bf16))
                     + dotf(e, Ws[f'{nm_e}/W0/e'])
                     + Bs[f'{nm_e}/b0'])                                         # [m,128]
            e_new = mlp_tail(nm_e, pre_e, DE).astype(bf16)                       # [m,8]

            # NodeModel: phi_x([x, scatter_add(e_new, dst), u[batch]])
            e_agg = dot_t(Sd, e_new).astype(bf16)                                # [n,8]
            ugx = dotf(ua, Ws[f'{nm_x}/W0/ua']) + dotf(ub, Ws[f'{nm_x}/W0/ub'])
            pre_x = (dotf(x, Ws[f'{nm_x}/W0/x'])
                     + dotf(e_agg, Ws[f'{nm_x}/W0/ea'])
                     + dotf(A, ugx.astype(bf16))
                     + Bs[f'{nm_x}/b0'])
            x_new = mlp_tail(nm_x, pre_x, DX).astype(bf16)                       # [n,8]

            # GlobalModel_NodeOnly: phi_u([scatter_add(x_new, batch), u])
            x_agg = dot_t(A, x_new).astype(bf16)                                 # [g,8]
            pre_u = (dotf(x_agg, Ws[f'{nm_u}/W0/xa'])
                     + dotf(ua, Ws[f'{nm_u}/W0/ua'])
                     + dotf(ub, Ws[f'{nm_u}/W0/ub'])
                     + Bs[f'{nm_u}/b0'])
            u_new = mlp_tail(nm_u, pre_u, DU).astype(bf16)                       # [g,8]
            return x_new, e_new, u_new

        x1, e1, u1 = x1_ref[...], e1_ref[...], u1_ref[...]
        x2, e2, u2 = x2_ref[...], e2_ref[...], u2_ref[...]
        S1s, S1d, A1 = s1s_ref[...], s1d_ref[...], a1_ref[...]
        S2s, S2d, A2 = s2s_ref[...], s2d_ref[...], a2_ref[...]

        for it in range(N_ITERS):   # all iterations fused in ONE pallas_call
            # u1 <- cat([u1, u2]); (x1, e1, u1) <- gnn1(...)
            x1, e1, u1n = gnn('g1', x1, e1, u1, u2, S1s, S1d, A1)
            # u2 <- cat([u2, u1]); (x2, e2, u2) <- gnn2(...)
            x2, e2, u2n = gnn('g2', x2, e2, u2, u1n, S2s, S2d, A2)
            u1, u2 = u1n, u2n
            # out_list.append(mlp(cat([u1, u2])))
            pre_y = (dotf(u1, Ws['out/W0/u1']) + dotf(u2, Ws['out/W0/u2'])
                     + Bs['out/b0'])
            y = mlp_tail('out', pre_y, LANE)          # [n_graphs, 128] lane-dense
            y_ref[it] = y

    return kernel


def alternating_double_forward(x1, e1, u1, x2, e2, u2,
                               S1s, S1d, A1, S2s, S2d, A2,
                               w_slab, b_slab, w_offs, b_rows):
    vmem = lambda: pl.BlockSpec(memory_space=pltpu.MemorySpace.VMEM)
    inputs = [x1, e1, u1, x2, e2, u2, S1s, S1d, A1, S2s, S2d, A2, w_slab, b_slab]
    y = pl.pallas_call(
        make_kernel(w_offs, b_rows),
        out_shape=jax.ShapeDtypeStruct((N_ITERS, N_GRAPHS, LANE), jnp.float32),
        in_specs=[vmem() for _ in inputs],
        out_specs=vmem(),
    )(*inputs)
    # out_list: N tensors of shape [n_graphs, f_out] (same as the torch module).
    return [y[i, :, :F_OUT] for i in range(N_ITERS)]


if __name__ == "__main__":
    key = jax.random.PRNGKey(0)
    w_slab, b_slab, w_offs, b_rows, key = init_params(key)

    def make_graph(key):
        key, kx, ke, ku, ks, kd = jax.random.split(key, 6)
        x = jax.random.normal(kx, (N_NODES, F_X), jnp.float32)
        e = jax.random.normal(ke, (N_EDGES, F_E), jnp.float32)
        u = jax.random.normal(ku, (N_GRAPHS, F_U), jnp.float32)
        src_l = jax.random.randint(ks, (N_GRAPHS, EDGES_PER_GRAPH), 0, NODES_PER_GRAPH)
        dst_l = jax.random.randint(kd, (N_GRAPHS, EDGES_PER_GRAPH), 0, NODES_PER_GRAPH)
        offs = (jnp.arange(N_GRAPHS) * NODES_PER_GRAPH)[:, None]
        src = (src_l + offs).reshape(-1)
        dst = (dst_l + offs).reshape(-1)
        batch = jnp.repeat(jnp.arange(N_GRAPHS, dtype=jnp.int32), NODES_PER_GRAPH)
        # bf16 operands; feature lanes zero-padded to storage width (exact).
        x_p = jnp.pad(x, ((0, 0), (0, DX - F_X))).astype(jnp.bfloat16)
        e_p = jnp.pad(e, ((0, 0), (0, DE - F_E))).astype(jnp.bfloat16)
        u_p = jnp.pad(u, ((0, 0), (0, DU - F_U))).astype(jnp.bfloat16)
        # one-hot gather/scatter operators (exact in bf16)
        Ss = jax.nn.one_hot(src, N_NODES, dtype=jnp.bfloat16)     # x[src] = Ss @ x
        Sd = jax.nn.one_hot(dst, N_NODES, dtype=jnp.bfloat16)     # scatter_add = Sd^T @ e
        A = jax.nn.one_hot(batch, N_GRAPHS, dtype=jnp.bfloat16)   # u[batch] = A @ u
        return (x_p, e_p, u_p, Ss, Sd, A), key

    g1, key = make_graph(key)
    g2, key = make_graph(key)
    x1, e1, u1, S1s, S1d, A1 = g1
    x2, e2, u2, S2s, S2d, A2 = g2

    outs = alternating_double_forward(x1, e1, u1, x2, e2, u2,
                                      S1s, S1d, A1, S2s, S2d, A2,
                                      w_slab, b_slab, w_offs, b_rows)
    for o in outs:
        jax.block_until_ready(o)
    assert len(outs) == N_ITERS and outs[0].shape == (N_GRAPHS, F_OUT)
    assert all(bool(jnp.all(jnp.isfinite(o))) for o in outs)
    print("KERNEL_OK")
</pallas_src>

<mosaic_0001>
module attributes {stable_mosaic.version = 11 : i64} {
  func.func @kernel(%arg0: memref<16x8xbf16, #tpu.memory_space<vmem>>, %arg1: memref<32x8xbf16, #tpu.memory_space<vmem>>, %arg2: memref<2x8xbf16, #tpu.memory_space<vmem>>, %arg3: memref<16x8xbf16, #tpu.memory_space<vmem>>, %arg4: memref<32x8xbf16, #tpu.memory_space<vmem>>, %arg5: memref<2x8xbf16, #tpu.memory_space<vmem>>, %arg6: memref<32x16xbf16, #tpu.memory_space<vmem>>, %arg7: memref<32x16xbf16, #tpu.memory_space<vmem>>, %arg8: memref<16x2xbf16, #tpu.memory_space<vmem>>, %arg9: memref<32x16xbf16, #tpu.memory_space<vmem>>, %arg10: memref<32x16xbf16, #tpu.memory_space<vmem>>, %arg11: memref<16x2xbf16, #tpu.memory_space<vmem>>, %arg12: memref<432x128xbf16, #tpu.memory_space<vmem>>, %arg13: memref<16x128xf32, #tpu.memory_space<vmem>>, %arg14: memref<2x2x128xf32, #tpu.memory_space<vmem>>) attributes {dimension_semantics = [], scalar_prefetch = 0 : i64, scratch_operands = 0 : i64, tpu.core_type = #tpu.core_type<tc>} {
    %c0 = arith.constant 0 : index
    %c0_0 = arith.constant 0 : index
    %0 = vector.load %arg12[%c0, %c0_0] : memref<432x128xbf16, #tpu.memory_space<vmem>>, vector<8x128xbf16>
    %c8 = arith.constant 8 : index
    %c0_1 = arith.constant 0 : index
    %1 = vector.load %arg12[%c8, %c0_1] : memref<432x128xbf16, #tpu.memory_space<vmem>>, vector<8x128xbf16>
    %c16 = arith.constant 16 : index
    %c0_2 = arith.constant 0 : index
    %2 = vector.load %arg12[%c16, %c0_2] : memref<432x128xbf16, #tpu.memory_space<vmem>>, vector<8x128xbf16>
    %c24 = arith.constant 24 : index
    %c0_3 = arith.constant 0 : index
    %3 = vector.load %arg12[%c24, %c0_3] : memref<432x128xbf16, #tpu.memory_space<vmem>>, vector<8x128xbf16>
    %c32 = arith.constant 32 : index
    %c0_4 = arith.constant 0 : index
    %4 = vector.load %arg12[%c32, %c0_4] : memref<432x128xbf16, #tpu.memory_space<vmem>>, vector<8x128xbf16>
    %c40 = arith.constant 40 : index
    %c0_5 = arith.constant 0 : index
    %5 = vector.load %arg12[%c40, %c0_5] : memref<432x128xbf16, #tpu.memory_space<vmem>>, vector<32x128xbf16>
    %c72 = arith.constant 72 : index
    %c0_6 = arith.constant 0 : index
    %6 = vector.load %arg12[%c72, %c0_6] : memref<432x128xbf16, #tpu.memory_space<vmem>>, vector<8x128xbf16>
    %c80 = arith.constant 80 : index
    %c0_7 = arith.constant 0 : index
    %7 = vector.load %arg12[%c80, %c0_7] : memref<432x128xbf16, #tpu.memory_space<vmem>>, vector<8x128xbf16>
    %c88 = arith.constant 88 : index
    %c0_8 = arith.constant 0 : index
    %8 = vector.load %arg12[%c88, %c0_8] : memref<432x128xbf16, #tpu.memory_space<vmem>>, vector<8x128xbf16>
    %c96 = arith.constant 96 : index
    %c0_9 = arith.constant 0 : index
    %9 = vector.load %arg12[%c96, %c0_9] : memref<432x128xbf16, #tpu.memory_space<vmem>>, vector<8x128xbf16>
    %c104 = arith.constant 104 : index
    %c0_10 = arith.constant 0 : index
    %10 = vector.load %arg12[%c104, %c0_10] : memref<432x128xbf16, #tpu.memory_space<vmem>>, vector<32x128xbf16>
    %c136 = arith.constant 136 : index
    %c0_11 = arith.constant 0 : index
    %11 = vector.load %arg12[%c136, %c0_11] : memref<432x128xbf16, #tpu.memory_space<vmem>>, vector<8x128xbf16>
    %c144 = arith.constant 144 : index
    %c0_12 = arith.constant 0 : index
    %12 = vector.load %arg12[%c144, %c0_12] : memref<432x128xbf16, #tpu.memory_space<vmem>>, vector<8x128xbf16>
    %c152 = arith.constant 152 : index
    %c0_13 = arith.constant 0 : index
    %13 = vector.load %arg12[%c152, %c0_13] : memref<432x128xbf16, #tpu.memory_space<vmem>>, vector<8x128xbf16>
    %c160 = arith.constant 160 : index
    %c0_14 = arith.constant 0 : index
    %14 = vector.load %arg12[%c160, %c0_14] : memref<432x128xbf16, #tpu.memory_space<vmem>>, vector<32x128xbf16>
    %c192 = arith.constant 192 : index
    %c0_15 = arith.constant 0 : index
    %15 = vector.load %arg12[%c192, %c0_15] : memref<432x128xbf16, #tpu.memory_space<vmem>>, vector<8x128xbf16>
    %c200 = arith.constant 200 : index
    %c0_16 = arith.constant 0 : index
    %16 = vector.load %arg12[%c200, %c0_16] : memref<432x128xbf16, #tpu.memory_space<vmem>>, vector<8x128xbf16>
    %c208 = arith.constant 208 : index
    %c0_17 = arith.constant 0 : index
    %17 = vector.load %arg12[%c208, %c0_17] : memref<432x128xbf16, #tpu.memory_space<vmem>>, vector<8x128xbf16>
    %c216 = arith.constant 216 : index
    %c0_18 = arith.constant 0 : index
    %18 = vector.load %arg12[%c216, %c0_18] : memref<432x128xbf16, #tpu.memory_space<vmem>>, vector<8x128xbf16>
    %c224 = arith.constant 224 : index
    %c0_19 = arith.constant 0 : index
    %19 = vector.load %arg12[%c224, %c0_19] : memref<432x128xbf16, #tpu.memory_space<vmem>>, vector<8x128xbf16>
    %c232 = arith.constant 232 : index
    %c0_20 = arith.constant 0 : index
    %20 = vector.load %arg12[%c232, %c0_20] : memref<432x128xbf16, #tpu.memory_space<vmem>>, vector<32x128xbf16>
    %c264 = arith.constant 264 : index
    %c0_21 = arith.constant 0 : index
    %21 = vector.load %arg12[%c264, %c0_21] : memref<432x128xbf16, #tpu.memory_space<vmem>>, vector<8x128xbf16>
    %c272 = arith.constant 272 : index
    %c0_22 = arith.constant 0 : index
    %22 = vector.load %arg12[%c272, %c0_22] : memref<432x128xbf16, #tpu.memory_space<vmem>>, vector<8x128xbf16>
    %c280 = arith.constant 280 : index
    %c0_23 = arith.constant 0 : index
    %23 = vector.load %arg12[%c280, %c0_23] : memref<432x128xbf16, #tpu.memory_space<vmem>>, vector<8x128xbf16>
    %c288 = arith.constant 288 : index
    %c0_24 = arith.constant 0 : index
    %24 = vector.load %arg12[%c288, %c0_24] : memref<432x128xbf16, #tpu.memory_space<vmem>>, vector<8x128xbf16>
    %c296 = arith.constant 296 : index
    %c0_25 = arith.constant 0 : index
    %25 = vector.load %arg12[%c296, %c0_25] : memref<432x128xbf16, #tpu.memory_space<vmem>>, vector<32x128xbf16>
    %c328 = arith.constant 328 : index
    %c0_26 = arith.constant 0 : index
    %26 = vector.load %arg12[%c328, %c0_26] : memref<432x128xbf16, #tpu.memory_space<vmem>>, vector<8x128xbf16>
    %c336 = arith.constant 336 : index
    %c0_27 = arith.constant 0 : index
    %27 = vector.load %arg12[%c336, %c0_27] : memref<432x128xbf16, #tpu.memory_space<vmem>>, vector<8x128xbf16>
    %c344 = arith.constant 344 : index
    %c0_28 = arith.constant 0 : index
    %28 = vector.load %arg12[%c344, %c0_28] : memref<432x128xbf16, #tpu.memory_space<vmem>>, vector<8x128xbf16>
    %c352 = arith.constant 352 : index
    %c0_29 = arith.constant 0 : index
    %29 = vector.load %arg12[%c352, %c0_29] : memref<432x128xbf16, #tpu.memory_space<vmem>>, vector<32x128xbf16>
    %c384 = arith.constant 384 : index
    %c0_30 = arith.constant 0 : index
    %30 = vector.load %arg12[%c384, %c0_30] : memref<432x128xbf16, #tpu.memory_space<vmem>>, vector<8x128xbf16>
    %c392 = arith.constant 392 : index
    %c0_31 = arith.constant 0 : index
    %31 = vector.load %arg12[%c392, %c0_31] : memref<432x128xbf16, #tpu.memory_space<vmem>>, vector<8x128xbf16>
    %c400 = arith.constant 400 : index
    %c0_32 = arith.constant 0 : index
    %32 = vector.load %arg12[%c400, %c0_32] : memref<432x128xbf16, #tpu.memory_space<vmem>>, vector<32x128xbf16>
    %c0_33 = arith.constant 0 : index
    %c0_34 = arith.constant 0 : index
    %33 = vector.load %arg13[%c0_33, %c0_34] : memref<16x128xf32, #tpu.memory_space<vmem>>, vector<16x128xf32>
    %34 = vector.extract_strided_slice %33 {offsets = [0, 0], sizes = [1, 128], strides = [1, 1]} : vector<16x128xf32> to vector<1x128xf32>
    %35 = vector.extract_strided_slice %33 {offsets = [1, 0], sizes = [1, 128], strides = [1, 1]} : vector<16x128xf32> to vector<1x128xf32>
    %36 = vector.extract_strided_slice %33 {offsets = [2, 0], sizes = [1, 128], strides = [1, 1]} : vector<16x128xf32> to vector<1x128xf32>
    %37 = vector.extract_strided_slice %33 {offsets = [3, 0], sizes = [1, 128], strides = [1, 1]} : vector<16x128xf32> to vector<1x128xf32>
    %38 = vector.extract_strided_slice %33 {offsets = [4, 0], sizes = [1, 128], strides = [1, 1]} : vector<16x128xf32> to vector<1x128xf32>
    %39 = vector.extract_strided_slice %33 {offsets = [5, 0], sizes = [1, 128], strides = [1, 1]} : vector<16x128xf32> to vector<1x128xf32>
    %40 = vector.extract_strided_slice %33 {offsets = [6, 0], sizes = [1, 128], strides = [1, 1]} : vector<16x128xf32> to vector<1x128xf32>
    %41 = vector.extract_strided_slice %33 {offsets = [7, 0], sizes = [1, 128], strides = [1, 1]} : vector<16x128xf32> to vector<1x128xf32>
    %42 = vector.extract_strided_slice %33 {offsets = [8, 0], sizes = [1, 128], strides = [1, 1]} : vector<16x128xf32> to vector<1x128xf32>
    %43 = vector.extract_strided_slice %33 {offsets = [9, 0], sizes = [1, 128], strides = [1, 1]} : vector<16x128xf32> to vector<1x128xf32>
    %44 = vector.extract_strided_slice %33 {offsets = [10, 0], sizes = [1, 128], strides = [1, 1]} : vector<16x128xf32> to vector<1x128xf32>
    %45 = vector.extract_strided_slice %33 {offsets = [11, 0], sizes = [1, 128], strides = [1, 1]} : vector<16x128xf32> to vector<1x128xf32>
    %46 = vector.extract_strided_slice %33 {offsets = [12, 0], sizes = [1, 128], strides = [1, 1]} : vector<16x128xf32> to vector<1x128xf32>
    %47 = vector.extract_strided_slice %33 {offsets = [13, 0], sizes = [1, 128], strides = [1, 1]} : vector<16x128xf32> to vector<1x128xf32>
    %c0_35 = arith.constant 0 : index
    %c0_36 = arith.constant 0 : index
    %48 = vector.load %arg0[%c0_35, %c0_36] : memref<16x8xbf16, #tpu.memory_space<vmem>>, vector<16x8xbf16>
    %c0_37 = arith.constant 0 : index
    %c0_38 = arith.constant 0 : index
    %49 = vector.load %arg1[%c0_37, %c0_38] : memref<32x8xbf16, #tpu.memory_space<vmem>>, vector<32x8xbf16>
    %c0_39 = arith.constant 0 : index
    %c0_40 = arith.constant 0 : index
    %50 = vector.load %arg2[%c0_39, %c0_40] : memref<2x8xbf16, #tpu.memory_space<vmem>>, vector<2x8xbf16>
    %c0_41 = arith.constant 0 : index
    %c0_42 = arith.constant 0 : index
    %51 = vector.load %arg3[%c0_41, %c0_42] : memref<16x8xbf16, #tpu.memory_space<vmem>>, vector<16x8xbf16>
    %c0_43 = arith.constant 0 : index
    %c0_44 = arith.constant 0 : index
    %52 = vector.load %arg4[%c0_43, %c0_44] : memref<32x8xbf16, #tpu.memory_space<vmem>>, vector<32x8xbf16>
    %c0_45 = arith.constant 0 : index
    %c0_46 = arith.constant 0 : index
    %53 = vector.load %arg5[%c0_45, %c0_46] : memref<2x8xbf16, #tpu.memory_space<vmem>>, vector<2x8xbf16>
    %c0_47 = arith.constant 0 : index
    %c0_48 = arith.constant 0 : index
    %54 = vector.load %arg6[%c0_47, %c0_48] : memref<32x16xbf16, #tpu.memory_space<vmem>>, vector<32x16xbf16>
    %c0_49 = arith.constant 0 : index
    %c0_50 = arith.constant 0 : index
    %55 = vector.load %arg7[%c0_49, %c0_50] : memref<32x16xbf16, #tpu.memory_space<vmem>>, vector<32x16xbf16>
    %c0_51 = arith.constant 0 : index
    %c0_52 = arith.constant 0 : index
    %56 = vector.load %arg8[%c0_51, %c0_52] : memref<16x2xbf16, #tpu.memory_space<vmem>>, vector<16x2xbf16>
    %c0_53 = arith.constant 0 : index
    %c0_54 = arith.constant 0 : index
    %57 = vector.load %arg9[%c0_53, %c0_54] : memref<32x16xbf16, #tpu.memory_space<vmem>>, vector<32x16xbf16>
    %c0_55 = arith.constant 0 : index
    %c0_56 = arith.constant 0 : index
    %58 = vector.load %arg10[%c0_55, %c0_56] : memref<32x16xbf16, #tpu.memory_space<vmem>>, vector<32x16xbf16>
    %c0_57 = arith.constant 0 : index
    %c0_58 = arith.constant 0 : index
    %59 = vector.load %arg11[%c0_57, %c0_58] : memref<16x2xbf16, #tpu.memory_space<vmem>>, vector<16x2xbf16>
    %cst = arith.constant dense<0.000000e+00> : vector<2x128xf32>
    %60 = tpu.matmul %50, %3, %cst {dimension_numbers = #tpu.dot_dimension_numbers<[1], [0], [0], [1], [0, 0, 1, 1], [], []>} : vector<2x8xbf16>, vector<8x128xbf16>, vector<2x128xf32> -> vector<2x128xf32>
    %cst_59 = arith.constant dense<0.000000e+00> : vector<2x128xf32>
    %61 = tpu.matmul %53, %4, %cst_59 {dimension_numbers = #tpu.dot_dimension_numbers<[1], [0], [0], [1], [0, 0, 1, 1], [], []>} : vector<2x8xbf16>, vector<8x128xbf16>, vector<2x128xf32> -> vector<2x128xf32>
    %62 = arith.addf %60, %61 : vector<2x128xf32>
    %63 = arith.truncf %62 : vector<2x128xf32> to vector<2x128xbf16>
    %cst_60 = arith.constant dense<0.000000e+00> : vector<16x128xf32>
    %64 = tpu.matmul %56, %63, %cst_60 {dimension_numbers = #tpu.dot_dimension_numbers<[1], [0], [0], [1], [0, 0, 1, 1], [], []>} : vector<16x2xbf16>, vector<2x128xbf16>, vector<16x128xf32> -> vector<16x128xf32>
    %cst_61 = arith.constant dense<0.000000e+00> : vector<16x128xf32>
    %65 = tpu.matmul %48, %0, %cst_61 {dimension_numbers = #tpu.dot_dimension_numbers<[1], [0], [0], [1], [0, 0, 1, 1], [], []>} : vector<16x8xbf16>, vector<8x128xbf16>, vector<16x128xf32> -> vector<16x128xf32>
    %cst_62 = arith.constant dense<0.000000e+00> : vector<16x128xf32>
    %66 = tpu.matmul %48, %1, %cst_62 {dimension_numbers = #tpu.dot_dimension_numbers<[1], [0], [0], [1], [0, 0, 1, 1], [], []>} : vector<16x8xbf16>, vector<8x128xbf16>, vector<16x128xf32> -> vector<16x128xf32>
    %67 = arith.addf %65, %64 : vector<16x128xf32>
    %68 = arith.truncf %67 : vector<16x128xf32> to vector<16x128xbf16>
    %cst_63 = arith.constant dense<0.000000e+00> : vector<32x128xf32>
    %69 = tpu.matmul %54, %68, %cst_63 {dimension_numbers = #tpu.dot_dimension_numbers<[1], [0], [0], [1], [0, 0, 1, 1], [], []>} : vector<32x16xbf16>, vector<16x128xbf16>, vector<32x128xf32> -> vector<32x128xf32>
    %70 = arith.truncf %66 : vector<16x128xf32> to vector<16x128xbf16>
    %cst_64 = arith.constant dense<0.000000e+00> : vector<32x128xf32>
    %71 = tpu.matmul %55, %70, %cst_64 {dimension_numbers = #tpu.dot_dimension_numbers<[1], [0], [0], [1], [0, 0, 1, 1], [], []>} : vector<32x16xbf16>, vector<16x128xbf16>, vector<32x128xf32> -> vector<32x128xf32>
    %72 = arith.addf %69, %71 : vector<32x128xf32>
    %cst_65 = arith.constant dense<0.000000e+00> : vector<32x128xf32>
    %73 = tpu.matmul %49, %2, %cst_65 {dimension_numbers = #tpu.dot_dimension_numbers<[1], [0], [0], [1], [0, 0, 1, 1], [], []>} : vector<32x8xbf16>, vector<8x128xbf16>, vector<32x128xf32> -> vector<32x128xf32>
    %74 = arith.addf %72, %73 : vector<32x128xf32>
    %75 = vector.broadcast %34 : vector<1x128xf32> to vector<32x128xf32>
    %76 = arith.addf %74, %75 : vector<32x128xf32>
    %cst_66 = arith.constant 0.000000e+00 : f32
    %77 = vector.broadcast %cst_66 : f32 to vector<32x128xf32>
    %78 = arith.maximumf %76, %77 : vector<32x128xf32>
    %79 = vector.extract_strided_slice %78 {offsets = [0, 0], sizes = [32, 32], strides = [1, 1]} : vector<32x128xf32> to vector<32x32xf32>
    %80 = arith.truncf %79 : vector<32x32xf32> to vector<32x32xbf16>
    %cst_67 = arith.constant dense<0.000000e+00> : vector<32x128xf32>
    %81 = tpu.matmul %80, %5, %cst_67 {dimension_numbers = #tpu.dot_dimension_numbers<[1], [0], [0], [1], [0, 0, 1, 1], [], []>} : vector<32x32xbf16>, vector<32x128xbf16>, vector<32x128xf32> -> vector<32x128xf32>
    %82 = vector.broadcast %35 : vector<1x128xf32> to vector<32x128xf32>
    %83 = arith.addf %81, %82 : vector<32x128xf32>
    %84 = vector.extract_strided_slice %83 {offsets = [0, 0], sizes = [32, 8], strides = [1, 1]} : vector<32x128xf32> to vector<32x8xf32>
    %85 = arith.truncf %84 : vector<32x8xf32> to vector<32x8xbf16>
    %cst_68 = arith.constant dense<0.000000e+00> : vector<16x8xf32>
    %86 = tpu.matmul %55, %85, %cst_68 {dimension_numbers = #tpu.dot_dimension_numbers<[0], [0], [1], [1], [0, 1, 1, 1], [], []>} : vector<32x16xbf16>, vector<32x8xbf16>, vector<16x8xf32> -> vector<16x8xf32>
    %87 = arith.truncf %86 : vector<16x8xf32> to vector<16x8xbf16>
    %cst_69 = arith.constant dense<0.000000e+00> : vector<2x128xf32>
    %88 = tpu.matmul %50, %8, %cst_69 {dimension_numbers = #tpu.dot_dimension_numbers<[1], [0], [0], [1], [0, 0, 1, 1], [], []>} : vector<2x8xbf16>, vector<8x128xbf16>, vector<2x128xf32> -> vector<2x128xf32>
    %cst_70 = arith.constant dense<0.000000e+00> : vector<2x128xf32>
    %89 = tpu.matmul %53, %9, %cst_70 {dimension_numbers = #tpu.dot_dimension_numbers<[1], [0], [0], [1], [0, 0, 1, 1], [], []>} : vector<2x8xbf16>, vector<8x128xbf16>, vector<2x128xf32> -> vector<2x128xf32>
    %90 = arith.addf %88, %89 : vector<2x128xf32>
    %cst_71 = arith.constant dense<0.000000e+00> : vector<16x128xf32>
    %91 = tpu.matmul %48, %6, %cst_71 {dimension_numbers = #tpu.dot_dimension_numbers<[1], [0], [0], [1], [0, 0, 1, 1], [], []>} : vector<16x8xbf16>, vector<8x128xbf16>, vector<16x128xf32> -> vector<16x128xf32>
    %cst_72 = arith.constant dense<0.000000e+00> : vector<16x128xf32>
    %92 = tpu.matmul %87, %7, %cst_72 {dimension_numbers = #tpu.dot_dimension_numbers<[1], [0], [0], [1], [0, 0, 1, 1], [], []>} : vector<16x8xbf16>, vector<8x128xbf16>, vector<16x128xf32> -> vector<16x128xf32>
    %93 = arith.addf %91, %92 : vector<16x128xf32>
    %94 = arith.truncf %90 : vector<2x128xf32> to vector<2x128xbf16>
    %cst_73 = arith.constant dense<0.000000e+00> : vector<16x128xf32>
    %95 = tpu.matmul %56, %94, %cst_73 {dimension_numbers = #tpu.dot_dimension_numbers<[1], [0], [0], [1], [0, 0, 1, 1], [], []>} : vector<16x2xbf16>, vector<2x128xbf16>, vector<16x128xf32> -> vector<16x128xf32>
    %96 = arith.addf %93, %95 : vector<16x128xf32>
    %97 = vector.broadcast %36 : vector<1x128xf32> to vector<16x128xf32>
    %98 = arith.addf %96, %97 : vector<16x128xf32>
    %cst_74 = arith.constant 0.000000e+00 : f32
    %99 = vector.broadcast %cst_74 : f32 to vector<16x128xf32>
    %100 = arith.maximumf %98, %99 : vector<16x128xf32>
    %101 = vector.extract_strided_slice %100 {offsets = [0, 0], sizes = [16, 32], strides = [1, 1]} : vector<16x128xf32> to vector<16x32xf32>
    %102 = arith.truncf %101 : vector<16x32xf32> to vector<16x32xbf16>
    %cst_75 = arith.constant dense<0.000000e+00> : vector<16x128xf32>
    %103 = tpu.matmul %102, %10, %cst_75 {dimension_numbers = #tpu.dot_dimension_numbers<[1], [0], [0], [1], [0, 0, 1, 1], [], []>} : vector<16x32xbf16>, vector<32x128xbf16>, vector<16x128xf32> -> vector<16x128xf32>
    %104 = vector.broadcast %37 : vector<1x128xf32> to vector<16x128xf32>
    %105 = arith.addf %103, %104 : vector<16x128xf32>
    %106 = vector.extract_strided_slice %105 {offsets = [0, 0], sizes = [16, 8], strides = [1, 1]} : vector<16x128xf32> to vector<16x8xf32>
    %107 = arith.truncf %106 : vector<16x8xf32> to vector<16x8xbf16>
    %cst_76 = arith.constant dense<0.000000e+00> : vector<2x8xf32>
    %108 = tpu.matmul %56, %107, %cst_76 {dimension_numbers = #tpu.dot_dimension_numbers<[0], [0], [1], [1], [0, 1, 1, 1], [], []>} : vector<16x2xbf16>, vector<16x8xbf16>, vector<2x8xf32> -> vector<2x8xf32>
    %109 = arith.truncf %108 : vector<2x8xf32> to vector<2x8xbf16>
    %cst_77 = arith.constant dense<0.000000e+00> : vector<2x128xf32>
    %110 = tpu.matmul %109, %11, %cst_77 {dimension_numbers = #tpu.dot_dimension_numbers<[1], [0], [0], [1], [0, 0, 1, 1], [], []>} : vector<2x8xbf16>, vector<8x128xbf16>, vector<2x128xf32> -> vector<2x128xf32>
    %cst_78 = arith.constant dense<0.000000e+00> : vector<2x128xf32>
    %111 = tpu.matmul %50, %12, %cst_78 {dimension_numbers = #tpu.dot_dimension_numbers<[1], [0], [0], [1], [0, 0, 1, 1], [], []>} : vector<2x8xbf16>, vector<8x128xbf16>, vector<2x128xf32> -> vector<2x128xf32>
    %112 = arith.addf %110, %111 : vector<2x128xf32>
    %cst_79 = arith.constant dense<0.000000e+00> : vector<2x128xf32>
    %113 = tpu.matmul %53, %13, %cst_79 {dimension_numbers = #tpu.dot_dimension_numbers<[1], [0], [0], [1], [0, 0, 1, 1], [], []>} : vector<2x8xbf16>, vector<8x128xbf16>, vector<2x128xf32> -> vector<2x128xf32>
    %114 = arith.addf %112, %113 : vector<2x128xf32>
    %115 = vector.broadcast %38 : vector<1x128xf32> to vector<2x128xf32>
    %116 = arith.addf %114, %115 : vector<2x128xf32>
    %cst_80 = arith.constant 0.000000e+00 : f32
    %117 = vector.broadcast %cst_80 : f32 to vector<2x128xf32>
    %118 = arith.maximumf %116, %117 : vector<2x128xf32>
    %119 = vector.extract_strided_slice %118 {offsets = [0, 0], sizes = [2, 32], strides = [1, 1]} : vector<2x128xf32> to vector<2x32xf32>
    %120 = arith.truncf %119 : vector<2x32xf32> to vector<2x32xbf16>
    %cst_81 = arith.constant dense<0.000000e+00> : vector<2x128xf32>
    %121 = tpu.matmul %120, %14, %cst_81 {dimension_numbers = #tpu.dot_dimension_numbers<[1], [0], [0], [1], [0, 0, 1, 1], [], []>} : vector<2x32xbf16>, vector<32x128xbf16>, vector<2x128xf32> -> vector<2x128xf32>
    %122 = vector.broadcast %39 : vector<1x128xf32> to vector<2x128xf32>
    %123 = arith.addf %121, %122 : vector<2x128xf32>
    %124 = vector.extract_strided_slice %123 {offsets = [0, 0], sizes = [2, 8], strides = [1, 1]} : vector<2x128xf32> to vector<2x8xf32>
    %125 = arith.truncf %124 : vector<2x8xf32> to vector<2x8xbf16>
    %cst_82 = arith.constant dense<0.000000e+00> : vector<2x128xf32>
    %126 = tpu.matmul %53, %18, %cst_82 {dimension_numbers = #tpu.dot_dimension_numbers<[1], [0], [0], [1], [0, 0, 1, 1], [], []>} : vector<2x8xbf16>, vector<8x128xbf16>, vector<2x128xf32> -> vector<2x128xf32>
    %cst_83 = arith.constant dense<0.000000e+00> : vector<2x128xf32>
    %127 = tpu.matmul %125, %19, %cst_83 {dimension_numbers = #tpu.dot_dimension_numbers<[1], [0], [0], [1], [0, 0, 1, 1], [], []>} : vector<2x8xbf16>, vector<8x128xbf16>, vector<2x128xf32> -> vector<2x128xf32>
    %128 = arith.addf %126, %127 : vector<2x128xf32>
    %129 = arith.truncf %128 : vector<2x128xf32> to vector<2x128xbf16>
    %cst_84 = arith.constant dense<0.000000e+00> : vector<16x128xf32>
    %130 = tpu.matmul %59, %129, %cst_84 {dimension_numbers = #tpu.dot_dimension_numbers<[1], [0], [0], [1], [0, 0, 1, 1], [], []>} : vector<16x2xbf16>, vector<2x128xbf16>, vector<16x128xf32> -> vector<16x128xf32>
    %cst_85 = arith.constant dense<0.000000e+00> : vector<16x128xf32>
    %131 = tpu.matmul %51, %15, %cst_85 {dimension_numbers = #tpu.dot_dimension_numbers<[1], [0], [0], [1], [0, 0, 1, 1], [], []>} : vector<16x8xbf16>, vector<8x128xbf16>, vector<16x128xf32> -> vector<16x128xf32>
    %cst_86 = arith.constant dense<0.000000e+00> : vector<16x128xf32>
    %132 = tpu.matmul %51, %16, %cst_86 {dimension_numbers = #tpu.dot_dimension_numbers<[1], [0], [0], [1], [0, 0, 1, 1], [], []>} : vector<16x8xbf16>, vector<8x128xbf16>, vector<16x128xf32> -> vector<16x128xf32>
    %133 = arith.addf %131, %130 : vector<16x128xf32>
    %134 = arith.truncf %133 : vector<16x128xf32> to vector<16x128xbf16>
    %cst_87 = arith.constant dense<0.000000e+00> : vector<32x128xf32>
    %135 = tpu.matmul %57, %134, %cst_87 {dimension_numbers = #tpu.dot_dimension_numbers<[1], [0], [0], [1], [0, 0, 1, 1], [], []>} : vector<32x16xbf16>, vector<16x128xbf16>, vector<32x128xf32> -> vector<32x128xf32>
    %136 = arith.truncf %132 : vector<16x128xf32> to vector<16x128xbf16>
    %cst_88 = arith.constant dense<0.000000e+00> : vector<32x128xf32>
    %137 = tpu.matmul %58, %136, %cst_88 {dimension_numbers = #tpu.dot_dimension_numbers<[1], [0], [0], [1], [0, 0, 1, 1], [], []>} : vector<32x16xbf16>, vector<16x128xbf16>, vector<32x128xf32> -> vector<32x128xf32>
    %138 = arith.addf %135, %137 : vector<32x128xf32>
    %cst_89 = arith.constant dense<0.000000e+00> : vector<32x128xf32>
    %139 = tpu.matmul %52, %17, %cst_89 {dimension_numbers = #tpu.dot_dimension_numbers<[1], [0], [0], [1], [0, 0, 1, 1], [], []>} : vector<32x8xbf16>, vector<8x128xbf16>, vector<32x128xf32> -> vector<32x128xf32>
    %140 = arith.addf %138, %139 : vector<32x128xf32>
    %141 = vector.broadcast %40 : vector<1x128xf32> to vector<32x128xf32>
    %142 = arith.addf %140, %141 : vector<32x128xf32>
    %cst_90 = arith.constant 0.000000e+00 : f32
    %143 = vector.broadcast %cst_90 : f32 to vector<32x128xf32>
    %144 = arith.maximumf %142, %143 : vector<32x128xf32>
    %145 = vector.extract_strided_slice %144 {offsets = [0, 0], sizes = [32, 32], strides = [1, 1]} : vector<32x128xf32> to vector<32x32xf32>
    %146 = arith.truncf %145 : vector<32x32xf32> to vector<32x32xbf16>
    %cst_91 = arith.constant dense<0.000000e+00> : vector<32x128xf32>
    %147 = tpu.matmul %146, %20, %cst_91 {dimension_numbers = #tpu.dot_dimension_numbers<[1], [0], [0], [1], [0, 0, 1, 1], [], []>} : vector<32x32xbf16>, vector<32x128xbf16>, vector<32x128xf32> -> vector<32x128xf32>
    %148 = vector.broadcast %41 : vector<1x128xf32> to vector<32x128xf32>
    %149 = arith.addf %147, %148 : vector<32x128xf32>
    %150 = vector.extract_strided_slice %149 {offsets = [0, 0], sizes = [32, 8], strides = [1, 1]} : vector<32x128xf32> to vector<32x8xf32>
    %151 = arith.truncf %150 : vector<32x8xf32> to vector<32x8xbf16>
    %cst_92 = arith.constant dense<0.000000e+00> : vector<16x8xf32>
    %152 = tpu.matmul %58, %151, %cst_92 {dimension_numbers = #tpu.dot_dimension_numbers<[0], [0], [1], [1], [0, 1, 1, 1], [], []>} : vector<32x16xbf16>, vector<32x8xbf16>, vector<16x8xf32> -> vector<16x8xf32>
    %153 = arith.truncf %152 : vector<16x8xf32> to vector<16x8xbf16>
    %cst_93 = arith.constant dense<0.000000e+00> : vector<2x128xf32>
    %154 = tpu.matmul %53, %23, %cst_93 {dimension_numbers = #tpu.dot_dimension_numbers<[1], [0], [0], [1], [0, 0, 1, 1], [], []>} : vector<2x8xbf16>, vector<8x128xbf16>, vector<2x128xf32> -> vector<2x128xf32>
    %cst_94 = arith.constant dense<0.000000e+00> : vector<2x128xf32>
    %155 = tpu.matmul %125, %24, %cst_94 {dimension_numbers = #tpu.dot_dimension_numbers<[1], [0], [0], [1], [0, 0, 1, 1], [], []>} : vector<2x8xbf16>, vector<8x128xbf16>, vector<2x128xf32> -> vector<2x128xf32>
    %156 = arith.addf %154, %155 : vector<2x128xf32>
    %cst_95 = arith.constant dense<0.000000e+00> : vector<16x128xf32>
    %157 = tpu.matmul %51, %21, %cst_95 {dimension_numbers = #tpu.dot_dimension_numbers<[1], [0], [0], [1], [0, 0, 1, 1], [], []>} : vector<16x8xbf16>, vector<8x128xbf16>, vector<16x128xf32> -> vector<16x128xf32>
    %cst_96 = arith.constant dense<0.000000e+00> : vector<16x128xf32>
    %158 = tpu.matmul %153, %22, %cst_96 {dimension_numbers = #tpu.dot_dimension_numbers<[1], [0], [0], [1], [0, 0, 1, 1], [], []>} : vector<16x8xbf16>, vector<8x128xbf16>, vector<16x128xf32> -> vector<16x128xf32>
    %159 = arith.addf %157, %158 : vector<16x128xf32>
    %160 = arith.truncf %156 : vector<2x128xf32> to vector<2x128xbf16>
    %cst_97 = arith.constant dense<0.000000e+00> : vector<16x128xf32>
    %161 = tpu.matmul %59, %160, %cst_97 {dimension_numbers = #tpu.dot_dimension_numbers<[1], [0], [0], [1], [0, 0, 1, 1], [], []>} : vector<16x2xbf16>, vector<2x128xbf16>, vector<16x128xf32> -> vector<16x128xf32>
    %162 = arith.addf %159, %161 : vector<16x128xf32>
    %163 = vector.broadcast %42 : vector<1x128xf32> to vector<16x128xf32>
    %164 = arith.addf %162, %163 : vector<16x128xf32>
    %cst_98 = arith.constant 0.000000e+00 : f32
    %165 = vector.broadcast %cst_98 : f32 to vector<16x128xf32>
    %166 = arith.maximumf %164, %165 : vector<16x128xf32>
    %167 = vector.extract_strided_slice %166 {offsets = [0, 0], sizes = [16, 32], strides = [1, 1]} : vector<16x128xf32> to vector<16x32xf32>
    %168 = arith.truncf %167 : vector<16x32xf32> to vector<16x32xbf16>
    %cst_99 = arith.constant dense<0.000000e+00> : vector<16x128xf32>
    %169 = tpu.matmul %168, %25, %cst_99 {dimension_numbers = #tpu.dot_dimension_numbers<[1], [0], [0], [1], [0, 0, 1, 1], [], []>} : vector<16x32xbf16>, vector<32x128xbf16>, vector<16x128xf32> -> vector<16x128xf32>
    %170 = vector.broadcast %43 : vector<1x128xf32> to vector<16x128xf32>
    %171 = arith.addf %169, %170 : vector<16x128xf32>
    %172 = vector.extract_strided_slice %171 {offsets = [0, 0], sizes = [16, 8], strides = [1, 1]} : vector<16x128xf32> to vector<16x8xf32>
    %173 = arith.truncf %172 : vector<16x8xf32> to vector<16x8xbf16>
    %cst_100 = arith.constant dense<0.000000e+00> : vector<2x8xf32>
    %174 = tpu.matmul %59, %173, %cst_100 {dimension_numbers = #tpu.dot_dimension_numbers<[0], [0], [1], [1], [0, 1, 1, 1], [], []>} : vector<16x2xbf16>, vector<16x8xbf16>, vector<2x8xf32> -> vector<2x8xf32>
    %175 = arith.truncf %174 : vector<2x8xf32> to vector<2x8xbf16>
    %cst_101 = arith.constant dense<0.000000e+00> : vector<2x128xf32>
    %176 = tpu.matmul %175, %26, %cst_101 {dimension_numbers = #tpu.dot_dimension_numbers<[1], [0], [0], [1], [0, 0, 1, 1], [], []>} : vector<2x8xbf16>, vector<8x128xbf16>, vector<2x128xf32> -> vector<2x128xf32>
    %cst_102 = arith.constant dense<0.000000e+00> : vector<2x128xf32>
    %177 = tpu.matmul %53, %27, %cst_102 {dimension_numbers = #tpu.dot_dimension_numbers<[1], [0], [0], [1], [0, 0, 1, 1], [], []>} : vector<2x8xbf16>, vector<8x128xbf16>, vector<2x128xf32> -> vector<2x128xf32>
    %178 = arith.addf %176, %177 : vector<2x128xf32>
    %cst_103 = arith.constant dense<0.000000e+00> : vector<2x128xf32>
    %179 = tpu.matmul %125, %28, %cst_103 {dimension_numbers = #tpu.dot_dimension_numbers<[1], [0], [0], [1], [0, 0, 1, 1], [], []>} : vector<2x8xbf16>, vector<8x128xbf16>, vector<2x128xf32> -> vector<2x128xf32>
    %180 = arith.addf %178, %179 : vector<2x128xf32>
    %181 = vector.broadcast %44 : vector<1x128xf32> to vector<2x128xf32>
    %182 = arith.addf %180, %181 : vector<2x128xf32>
    %cst_104 = arith.constant 0.000000e+00 : f32
    %183 = vector.broadcast %cst_104 : f32 to vector<2x128xf32>
    %184 = arith.maximumf %182, %183 : vector<2x128xf32>
    %185 = vector.extract_strided_slice %184 {offsets = [0, 0], sizes = [2, 32], strides = [1, 1]} : vector<2x128xf32> to vector<2x32xf32>
    %186 = arith.truncf %185 : vector<2x32xf32> to vector<2x32xbf16>
    %cst_105 = arith.constant dense<0.000000e+00> : vector<2x128xf32>
    %187 = tpu.matmul %186, %29, %cst_105 {dimension_numbers = #tpu.dot_dimension_numbers<[1], [0], [0], [1], [0, 0, 1, 1], [], []>} : vector<2x32xbf16>, vector<32x128xbf16>, vector<2x128xf32> -> vector<2x128xf32>
    %188 = vector.broadcast %45 : vector<1x128xf32> to vector<2x128xf32>
    %189 = arith.addf %187, %188 : vector<2x128xf32>
    %190 = vector.extract_strided_slice %189 {offsets = [0, 0], sizes = [2, 8], strides = [1, 1]} : vector<2x128xf32> to vector<2x8xf32>
    %191 = arith.truncf %190 : vector<2x8xf32> to vector<2x8xbf16>
    %cst_106 = arith.constant dense<0.000000e+00> : vector<2x128xf32>
    %192 = tpu.matmul %125, %30, %cst_106 {dimension_numbers = #tpu.dot_dimension_numbers<[1], [0], [0], [1], [0, 0, 1, 1], [], []>} : vector<2x8xbf16>, vector<8x128xbf16>, vector<2x128xf32> -> vector<2x128xf32>
    %cst_107 = arith.constant dense<0.000000e+00> : vector<2x128xf32>
    %193 = tpu.matmul %191, %31, %cst_107 {dimension_numbers = #tpu.dot_dimension_numbers<[1], [0], [0], [1], [0, 0, 1, 1], [], []>} : vector<2x8xbf16>, vector<8x128xbf16>, vector<2x128xf32> -> vector<2x128xf32>
    %194 = arith.addf %192, %193 : vector<2x128xf32>
    %195 = vector.broadcast %46 : vector<1x128xf32> to vector<2x128xf32>
    %196 = arith.addf %194, %195 : vector<2x128xf32>
    %cst_108 = arith.constant 0.000000e+00 : f32
    %197 = vector.broadcast %cst_108 : f32 to vector<2x128xf32>
    %198 = arith.maximumf %196, %197 : vector<2x128xf32>
    %199 = vector.extract_strided_slice %198 {offsets = [0, 0], sizes = [2, 32], strides = [1, 1]} : vector<2x128xf32> to vector<2x32xf32>
    %200 = arith.truncf %199 : vector<2x32xf32> to vector<2x32xbf16>
    %cst_109 = arith.constant dense<0.000000e+00> : vector<2x128xf32>
    %201 = tpu.matmul %200, %32, %cst_109 {dimension_numbers = #tpu.dot_dimension_numbers<[1], [0], [0], [1], [0, 0, 1, 1], [], []>} : vector<2x32xbf16>, vector<32x128xbf16>, vector<2x128xf32> -> vector<2x128xf32>
    %202 = vector.broadcast %47 : vector<1x128xf32> to vector<2x128xf32>
    %203 = arith.addf %201, %202 : vector<2x128xf32>
    %c0_110 = arith.constant 0 : index
    %c0_111 = arith.constant 0 : index
    %c0_112 = arith.constant 0 : index
    %204 = vector.load %arg14[%c0_110, %c0_111, %c0_112] : memref<2x2x128xf32, #tpu.memory_space<vmem>>, vector<1x2x128xf32>
    %205 = vector.shape_cast %204 : vector<1x2x128xf32> to vector<2x128xf32>
    %206 = vector.shape_cast %203 : vector<2x128xf32> to vector<1x2x128xf32>
    tpu.vector_store %arg14[%c0_110, %c0_111, %c0_112], %206 {strides = array<i32>} : memref<2x2x128xf32, #tpu.memory_space<vmem>>, vector<1x2x128xf32>,
    %cst_113 = arith.constant dense<0.000000e+00> : vector<2x128xf32>
    %207 = tpu.matmul %125, %3, %cst_113 {dimension_numbers = #tpu.dot_dimension_numbers<[1], [0], [0], [1], [0, 0, 1, 1], [], []>} : vector<2x8xbf16>, vector<8x128xbf16>, vector<2x128xf32> -> vector<2x128xf32>
    %cst_114 = arith.constant dense<0.000000e+00> : vector<2x128xf32>
    %208 = tpu.matmul %191, %4, %cst_114 {dimension_numbers = #tpu.dot_dimension_numbers<[1], [0], [0], [1], [0, 0, 1, 1], [], []>} : vector<2x8xbf16>, vector<8x128xbf16>, vector<2x128xf32> -> vector<2x128xf32>
    %209 = arith.addf %207, %208 : vector<2x128xf32>
    %210 = arith.truncf %209 : vector<2x128xf32> to vector<2x128xbf16>
    %cst_115 = arith.constant dense<0.000000e+00> : vector<16x128xf32>
    %211 = tpu.matmul %56, %210, %cst_115 {dimension_numbers = #tpu.dot_dimension_numbers<[1], [0], [0], [1], [0, 0, 1, 1], [], []>} : vector<16x2xbf16>, vector<2x128xbf16>, vector<16x128xf32> -> vector<16x128xf32>
    %cst_116 = arith.constant dense<0.000000e+00> : vector<16x128xf32>
    %212 = tpu.matmul %107, %0, %cst_116 {dimension_numbers = #tpu.dot_dimension_numbers<[1], [0], [0], [1], [0, 0, 1, 1], [], []>} : vector<16x8xbf16>, vector<8x128xbf16>, vector<16x128xf32> -> vector<16x128xf32>
    %cst_117 = arith.constant dense<0.000000e+00> : vector<16x128xf32>
    %213 = tpu.matmul %107, %1, %cst_117 {dimension_numbers = #tpu.dot_dimension_numbers<[1], [0], [0], [1], [0, 0, 1, 1], [], []>} : vector<16x8xbf16>, vector<8x128xbf16>, vector<16x128xf32> -> vector<16x128xf32>
    %214 = arith.addf %212, %211 : vector<16x128xf32>
    %215 = arith.truncf %214 : vector<16x128xf32> to vector<16x128xbf16>
    %cst_118 = arith.constant dense<0.000000e+00> : vector<32x128xf32>
    %216 = tpu.matmul %54, %215, %cst_118 {dimension_numbers = #tpu.dot_dimension_numbers<[1], [0], [0], [1], [0, 0, 1, 1], [], []>} : vector<32x16xbf16>, vector<16x128xbf16>, vector<32x128xf32> -> vector<32x128xf32>
    %217 = arith.truncf %213 : vector<16x128xf32> to vector<16x128xbf16>
    %cst_119 = arith.constant dense<0.000000e+00> : vector<32x128xf32>
    %218 = tpu.matmul %55, %217, %cst_119 {dimension_numbers = #tpu.dot_dimension_numbers<[1], [0], [0], [1], [0, 0, 1, 1], [], []>} : vector<32x16xbf16>, vector<16x128xbf16>, vector<32x128xf32> -> vector<32x128xf32>
    %219 = arith.addf %216, %218 : vector<32x128xf32>
    %cst_120 = arith.constant dense<0.000000e+00> : vector<32x128xf32>
    %220 = tpu.matmul %85, %2, %cst_120 {dimension_numbers = #tpu.dot_dimension_numbers<[1], [0], [0], [1], [0, 0, 1, 1], [], []>} : vector<32x8xbf16>, vector<8x128xbf16>, vector<32x128xf32> -> vector<32x128xf32>
    %221 = arith.addf %219, %220 : vector<32x128xf32>
    %222 = vector.broadcast %34 : vector<1x128xf32> to vector<32x128xf32>
    %223 = arith.addf %221, %222 : vector<32x128xf32>
    %cst_121 = arith.constant 0.000000e+00 : f32
    %224 = vector.broadcast %cst_121 : f32 to vector<32x128xf32>
    %225 = arith.maximumf %223, %224 : vector<32x128xf32>
    %226 = vector.extract_strided_slice %225 {offsets = [0, 0], sizes = [32, 32], strides = [1, 1]} : vector<32x128xf32> to vector<32x32xf32>
    %227 = arith.truncf %226 : vector<32x32xf32> to vector<32x32xbf16>
    %cst_122 = arith.constant dense<0.000000e+00> : vector<32x128xf32>
    %228 = tpu.matmul %227, %5, %cst_122 {dimension_numbers = #tpu.dot_dimension_numbers<[1], [0], [0], [1], [0, 0, 1, 1], [], []>} : vector<32x32xbf16>, vector<32x128xbf16>, vector<32x128xf32> -> vector<32x128xf32>
    %229 = vector.broadcast %35 : vector<1x128xf32> to vector<32x128xf32>
    %230 = arith.addf %228, %229 : vector<32x128xf32>
    %231 = vector.extract_strided_slice %230 {offsets = [0, 0], sizes = [32, 8], strides = [1, 1]} : vector<32x128xf32> to vector<32x8xf32>
    %232 = arith.truncf %231 : vector<32x8xf32> to vector<32x8xbf16>
    %cst_123 = arith.constant dense<0.000000e+00> : vector<16x8xf32>
    %233 = tpu.matmul %55, %232, %cst_123 {dimension_numbers = #tpu.dot_dimension_numbers<[0], [0], [1], [1], [0, 1, 1, 1], [], []>} : vector<32x16xbf16>, vector<32x8xbf16>, vector<16x8xf32> -> vector<16x8xf32>
    %234 = arith.truncf %233 : vector<16x8xf32> to vector<16x8xbf16>
    %cst_124 = arith.constant dense<0.000000e+00> : vector<2x128xf32>
    %235 = tpu.matmul %125, %8, %cst_124 {dimension_numbers = #tpu.dot_dimension_numbers<[1], [0], [0], [1], [0, 0, 1, 1], [], []>} : vector<2x8xbf16>, vector<8x128xbf16>, vector<2x128xf32> -> vector<2x128xf32>
    %cst_125 = arith.constant dense<0.000000e+00> : vector<2x128xf32>
    %236 = tpu.matmul %191, %9, %cst_125 {dimension_numbers = #tpu.dot_dimension_numbers<[1], [0], [0], [1], [0, 0, 1, 1], [], []>} : vector<2x8xbf16>, vector<8x128xbf16>, vector<2x128xf32> -> vector<2x128xf32>
    %237 = arith.addf %235, %236 : vector<2x128xf32>
    %cst_126 = arith.constant dense<0.000000e+00> : vector<16x128xf32>
    %238 = tpu.matmul %107, %6, %cst_126 {dimension_numbers = #tpu.dot_dimension_numbers<[1], [0], [0], [1], [0, 0, 1, 1], [], []>} : vector<16x8xbf16>, vector<8x128xbf16>, vector<16x128xf32> -> vector<16x128xf32>
    %cst_127 = arith.constant dense<0.000000e+00> : vector<16x128xf32>
    %239 = tpu.matmul %234, %7, %cst_127 {dimension_numbers = #tpu.dot_dimension_numbers<[1], [0], [0], [1], [0, 0, 1, 1], [], []>} : vector<16x8xbf16>, vector<8x128xbf16>, vector<16x128xf32> -> vector<16x128xf32>
    %240 = arith.addf %238, %239 : vector<16x128xf32>
    %241 = arith.truncf %237 : vector<2x128xf32> to vector<2x128xbf16>
    %cst_128 = arith.constant dense<0.000000e+00> : vector<16x128xf32>
    %242 = tpu.matmul %56, %241, %cst_128 {dimension_numbers = #tpu.dot_dimension_numbers<[1], [0], [0], [1], [0, 0, 1, 1], [], []>} : vector<16x2xbf16>, vector<2x128xbf16>, vector<16x128xf32> -> vector<16x128xf32>
    %243 = arith.addf %240, %242 : vector<16x128xf32>
    %244 = vector.broadcast %36 : vector<1x128xf32> to vector<16x128xf32>
    %245 = arith.addf %243, %244 : vector<16x128xf32>
    %cst_129 = arith.constant 0.000000e+00 : f32
    %246 = vector.broadcast %cst_129 : f32 to vector<16x128xf32>
    %247 = arith.maximumf %245, %246 : vector<16x128xf32>
    %248 = vector.extract_strided_slice %247 {offsets = [0, 0], sizes = [16, 32], strides = [1, 1]} : vector<16x128xf32> to vector<16x32xf32>
    %249 = arith.truncf %248 : vector<16x32xf32> to vector<16x32xbf16>
    %cst_130 = arith.constant dense<0.000000e+00> : vector<16x128xf32>
    %250 = tpu.matmul %249, %10, %cst_130 {dimension_numbers = #tpu.dot_dimension_numbers<[1], [0], [0], [1], [0, 0, 1, 1], [], []>} : vector<16x32xbf16>, vector<32x128xbf16>, vector<16x128xf32> -> vector<16x128xf32>
    %251 = vector.broadcast %37 : vector<1x128xf32> to vector<16x128xf32>
    %252 = arith.addf %250, %251 : vector<16x128xf32>
    %253 = vector.extract_strided_slice %252 {offsets = [0, 0], sizes = [16, 8], strides = [1, 1]} : vector<16x128xf32> to vector<16x8xf32>
    %254 = arith.truncf %253 : vector<16x8xf32> to vector<16x8xbf16>
    %cst_131 = arith.constant dense<0.000000e+00> : vector<2x8xf32>
    %255 = tpu.matmul %56, %254, %cst_131 {dimension_numbers = #tpu.dot_dimension_numbers<[0], [0], [1], [1], [0, 1, 1, 1], [], []>} : vector<16x2xbf16>, vector<16x8xbf16>, vector<2x8xf32> -> vector<2x8xf32>
    %256 = arith.truncf %255 : vector<2x8xf32> to vector<2x8xbf16>
    %cst_132 = arith.constant dense<0.000000e+00> : vector<2x128xf32>
    %257 = tpu.matmul %256, %11, %cst_132 {dimension_numbers = #tpu.dot_dimension_numbers<[1], [0], [0], [1], [0, 0, 1, 1], [], []>} : vector<2x8xbf16>, vector<8x128xbf16>, vector<2x128xf32> -> vector<2x128xf32>
    %cst_133 = arith.constant dense<0.000000e+00> : vector<2x128xf32>
    %258 = tpu.matmul %125, %12, %cst_133 {dimension_numbers = #tpu.dot_dimension_numbers<[1], [0], [0], [1], [0, 0, 1, 1], [], []>} : vector<2x8xbf16>, vector<8x128xbf16>, vector<2x128xf32> -> vector<2x128xf32>
    %259 = arith.addf %257, %258 : vector<2x128xf32>
    %cst_134 = arith.constant dense<0.000000e+00> : vector<2x128xf32>
    %260 = tpu.matmul %191, %13, %cst_134 {dimension_numbers = #tpu.dot_dimension_numbers<[1], [0], [0], [1], [0, 0, 1, 1], [], []>} : vector<2x8xbf16>, vector<8x128xbf16>, vector<2x128xf32> -> vector<2x128xf32>
    %261 = arith.addf %259, %260 : vector<2x128xf32>
    %262 = vector.broadcast %38 : vector<1x128xf32> to vector<2x128xf32>
    %263 = arith.addf %261, %262 : vector<2x128xf32>
    %cst_135 = arith.constant 0.000000e+00 : f32
    %264 = vector.broadcast %cst_135 : f32 to vector<2x128xf32>
    %265 = arith.maximumf %263, %264 : vector<2x128xf32>
    %266 = vector.extract_strided_slice %265 {offsets = [0, 0], sizes = [2, 32], strides = [1, 1]} : vector<2x128xf32> to vector<2x32xf32>
    %267 = arith.truncf %266 : vector<2x32xf32> to vector<2x32xbf16>
    %cst_136 = arith.constant dense<0.000000e+00> : vector<2x128xf32>
    %268 = tpu.matmul %267, %14, %cst_136 {dimension_numbers = #tpu.dot_dimension_numbers<[1], [0], [0], [1], [0, 0, 1, 1], [], []>} : vector<2x32xbf16>, vector<32x128xbf16>, vector<2x128xf32> -> vector<2x128xf32>
    %269 = vector.broadcast %39 : vector<1x128xf32> to vector<2x128xf32>
    %270 = arith.addf %268, %269 : vector<2x128xf32>
    %271 = vector.extract_strided_slice %270 {offsets = [0, 0], sizes = [2, 8], strides = [1, 1]} : vector<2x128xf32> to vector<2x8xf32>
    %272 = arith.truncf %271 : vector<2x8xf32> to vector<2x8xbf16>
    %cst_137 = arith.constant dense<0.000000e+00> : vector<2x128xf32>
    %273 = tpu.matmul %191, %18, %cst_137 {dimension_numbers = #tpu.dot_dimension_numbers<[1], [0], [0], [1], [0, 0, 1, 1], [], []>} : vector<2x8xbf16>, vector<8x128xbf16>, vector<2x128xf32> -> vector<2x128xf32>
    %cst_138 = arith.constant dense<0.000000e+00> : vector<2x128xf32>
    %274 = tpu.matmul %272, %19, %cst_138 {dimension_numbers = #tpu.dot_dimension_numbers<[1], [0], [0], [1], [0, 0, 1, 1], [], []>} : vector<2x8xbf16>, vector<8x128xbf16>, vector<2x128xf32> -> vector<2x128xf32>
    %275 = arith.addf %273, %274 : vector<2x128xf32>
    %276 = arith.truncf %275 : vector<2x128xf32> to vector<2x128xbf16>
    %cst_139 = arith.constant dense<0.000000e+00> : vector<16x128xf32>
    %277 = tpu.matmul %59, %276, %cst_139 {dimension_numbers = #tpu.dot_dimension_numbers<[1], [0], [0], [1], [0, 0, 1, 1], [], []>} : vector<16x2xbf16>, vector<2x128xbf16>, vector<16x128xf32> -> vector<16x128xf32>
    %cst_140 = arith.constant dense<0.000000e+00> : vector<16x128xf32>
    %278 = tpu.matmul %173, %15, %cst_140 {dimension_numbers = #tpu.dot_dimension_numbers<[1], [0], [0], [1], [0, 0, 1, 1], [], []>} : vector<16x8xbf16>, vector<8x128xbf16>, vector<16x128xf32> -> vector<16x128xf32>
    %cst_141 = arith.constant dense<0.000000e+00> : vector<16x128xf32>
    %279 = tpu.matmul %173, %16, %cst_141 {dimension_numbers = #tpu.dot_dimension_numbers<[1], [0], [0], [1], [0, 0, 1, 1], [], []>} : vector<16x8xbf16>, vector<8x128xbf16>, vector<16x128xf32> -> vector<16x128xf32>
    %280 = arith.addf %278, %277 : vector<16x128xf32>
    %281 = arith.truncf %280 : vector<16x128xf32> to vector<16x128xbf16>
    %cst_142 = arith.constant dense<0.000000e+00> : vector<32x128xf32>
    %282 = tpu.matmul %57, %281, %cst_142 {dimension_numbers = #tpu.dot_dimension_numbers<[1], [0], [0], [1], [0, 0, 1, 1], [], []>} : vector<32x16xbf16>, vector<16x128xbf16>, vector<32x128xf32> -> vector<32x128xf32>
    %283 = arith.truncf %279 : vector<16x128xf32> to vector<16x128xbf16>
    %cst_143 = arith.constant dense<0.000000e+00> : vector<32x128xf32>
    %284 = tpu.matmul %58, %283, %cst_143 {dimension_numbers = #tpu.dot_dimension_numbers<[1], [0], [0], [1], [0, 0, 1, 1], [], []>} : vector<32x16xbf16>, vector<16x128xbf16>, vector<32x128xf32> -> vector<32x128xf32>
    %285 = arith.addf %282, %284 : vector<32x128xf32>
    %cst_144 = arith.constant dense<0.000000e+00> : vector<32x128xf32>
    %286 = tpu.matmul %151, %17, %cst_144 {dimension_numbers = #tpu.dot_dimension_numbers<[1], [0], [0], [1], [0, 0, 1, 1], [], []>} : vector<32x8xbf16>, vector<8x128xbf16>, vector<32x128xf32> -> vector<32x128xf32>
    %287 = arith.addf %285, %286 : vector<32x128xf32>
    %288 = vector.broadcast %40 : vector<1x128xf32> to vector<32x128xf32>
    %289 = arith.addf %287, %288 : vector<32x128xf32>
    %cst_145 = arith.constant 0.000000e+00 : f32
    %290 = vector.broadcast %cst_145 : f32 to vector<32x128xf32>
    %291 = arith.maximumf %289, %290 : vector<32x128xf32>
    %292 = vector.extract_strided_slice %291 {offsets = [0, 0], sizes = [32, 32], strides = [1, 1]} : vector<32x128xf32> to vector<32x32xf32>
    %293 = arith.truncf %292 : vector<32x32xf32> to vector<32x32xbf16>
    %cst_146 = arith.constant dense<0.000000e+00> : vector<32x128xf32>
    %294 = tpu.matmul %293, %20, %cst_146 {dimension_numbers = #tpu.dot_dimension_numbers<[1], [0], [0], [1], [0, 0, 1, 1], [], []>} : vector<32x32xbf16>, vector<32x128xbf16>, vector<32x128xf32> -> vector<32x128xf32>
    %295 = vector.broadcast %41 : vector<1x128xf32> to vector<32x128xf32>
    %296 = arith.addf %294, %295 : vector<32x128xf32>
    %297 = vector.extract_strided_slice %296 {offsets = [0, 0], sizes = [32, 8], strides = [1, 1]} : vector<32x128xf32> to vector<32x8xf32>
    %298 = arith.truncf %297 : vector<32x8xf32> to vector<32x8xbf16>
    %cst_147 = arith.constant dense<0.000000e+00> : vector<16x8xf32>
    %299 = tpu.matmul %58, %298, %cst_147 {dimension_numbers = #tpu.dot_dimension_numbers<[0], [0], [1], [1], [0, 1, 1, 1], [], []>} : vector<32x16xbf16>, vector<32x8xbf16>, vector<16x8xf32> -> vector<16x8xf32>
    %300 = arith.truncf %299 : vector<16x8xf32> to vector<16x8xbf16>
    %cst_148 = arith.constant dense<0.000000e+00> : vector<2x128xf32>
    %301 = tpu.matmul %191, %23, %cst_148 {dimension_numbers = #tpu.dot_dimension_numbers<[1], [0], [0], [1], [0, 0, 1, 1], [], []>} : vector<2x8xbf16>, vector<8x128xbf16>, vector<2x128xf32> -> vector<2x128xf32>
    %cst_149 = arith.constant dense<0.000000e+00> : vector<2x128xf32>
    %302 = tpu.matmul %272, %24, %cst_149 {dimension_numbers = #tpu.dot_dimension_numbers<[1], [0], [0], [1], [0, 0, 1, 1], [], []>} : vector<2x8xbf16>, vector<8x128xbf16>, vector<2x128xf32> -> vector<2x128xf32>
    %303 = arith.addf %301, %302 : vector<2x128xf32>
    %cst_150 = arith.constant dense<0.000000e+00> : vector<16x128xf32>
    %304 = tpu.matmul %173, %21, %cst_150 {dimension_numbers = #tpu.dot_dimension_numbers<[1], [0], [0], [1], [0, 0, 1, 1], [], []>} : vector<16x8xbf16>, vector<8x128xbf16>, vector<16x128xf32> -> vector<16x128xf32>
    %cst_151 = arith.constant dense<0.000000e+00> : vector<16x128xf32>
    %305 = tpu.matmul %300, %22, %cst_151 {dimension_numbers = #tpu.dot_dimension_numbers<[1], [0], [0], [1], [0, 0, 1, 1], [], []>} : vector<16x8xbf16>, vector<8x128xbf16>, vector<16x128xf32> -> vector<16x128xf32>
    %306 = arith.addf %304, %305 : vector<16x128xf32>
    %307 = arith.truncf %303 : vector<2x128xf32> to vector<2x128xbf16>
    %cst_152 = arith.constant dense<0.000000e+00> : vector<16x128xf32>
    %308 = tpu.matmul %59, %307, %cst_152 {dimension_numbers = #tpu.dot_dimension_numbers<[1], [0], [0], [1], [0, 0, 1, 1], [], []>} : vector<16x2xbf16>, vector<2x128xbf16>, vector<16x128xf32> -> vector<16x128xf32>
    %309 = arith.addf %306, %308 : vector<16x128xf32>
    %310 = vector.broadcast %42 : vector<1x128xf32> to vector<16x128xf32>
    %311 = arith.addf %309, %310 : vector<16x128xf32>
    %cst_153 = arith.constant 0.000000e+00 : f32
    %312 = vector.broadcast %cst_153 : f32 to vector<16x128xf32>
    %313 = arith.maximumf %311, %312 : vector<16x128xf32>
    %314 = vector.extract_strided_slice %313 {offsets = [0, 0], sizes = [16, 32], strides = [1, 1]} : vector<16x128xf32> to vector<16x32xf32>
    %315 = arith.truncf %314 : vector<16x32xf32> to vector<16x32xbf16>
    %cst_154 = arith.constant dense<0.000000e+00> : vector<16x128xf32>
    %316 = tpu.matmul %315, %25, %cst_154 {dimension_numbers = #tpu.dot_dimension_numbers<[1], [0], [0], [1], [0, 0, 1, 1], [], []>} : vector<16x32xbf16>, vector<32x128xbf16>, vector<16x128xf32> -> vector<16x128xf32>
    %317 = vector.broadcast %43 : vector<1x128xf32> to vector<16x128xf32>
    %318 = arith.addf %316, %317 : vector<16x128xf32>
    %319 = vector.extract_strided_slice %318 {offsets = [0, 0], sizes = [16, 8], strides = [1, 1]} : vector<16x128xf32> to vector<16x8xf32>
    %320 = arith.truncf %319 : vector<16x8xf32> to vector<16x8xbf16>
    %cst_155 = arith.constant dense<0.000000e+00> : vector<2x8xf32>
    %321 = tpu.matmul %59, %320, %cst_155 {dimension_numbers = #tpu.dot_dimension_numbers<[0], [0], [1], [1], [0, 1, 1, 1], [], []>} : vector<16x2xbf16>, vector<16x8xbf16>, vector<2x8xf32> -> vector<2x8xf32>
    %322 = arith.truncf %321 : vector<2x8xf32> to vector<2x8xbf16>
    %cst_156 = arith.constant dense<0.000000e+00> : vector<2x128xf32>
    %323 = tpu.matmul %322, %26, %cst_156 {dimension_numbers = #tpu.dot_dimension_numbers<[1], [0], [0], [1], [0, 0, 1, 1], [], []>} : vector<2x8xbf16>, vector<8x128xbf16>, vector<2x128xf32> -> vector<2x128xf32>
    %cst_157 = arith.constant dense<0.000000e+00> : vector<2x128xf32>
    %324 = tpu.matmul %191, %27, %cst_157 {dimension_numbers = #tpu.dot_dimension_numbers<[1], [0], [0], [1], [0, 0, 1, 1], [], []>} : vector<2x8xbf16>, vector<8x128xbf16>, vector<2x128xf32> -> vector<2x128xf32>
    %325 = arith.addf %323, %324 : vector<2x128xf32>
    %cst_158 = arith.constant dense<0.000000e+00> : vector<2x128xf32>
    %326 = tpu.matmul %272, %28, %cst_158 {dimension_numbers = #tpu.dot_dimension_numbers<[1], [0], [0], [1], [0, 0, 1, 1], [], []>} : vector<2x8xbf16>, vector<8x128xbf16>, vector<2x128xf32> -> vector<2x128xf32>
    %327 = arith.addf %325, %326 : vector<2x128xf32>
    %328 = vector.broadcast %44 : vector<1x128xf32> to vector<2x128xf32>
    %329 = arith.addf %327, %328 : vector<2x128xf32>
    %cst_159 = arith.constant 0.000000e+00 : f32
    %330 = vector.broadcast %cst_159 : f32 to vector<2x128xf32>
    %331 = arith.maximumf %329, %330 : vector<2x128xf32>
    %332 = vector.extract_strided_slice %331 {offsets = [0, 0], sizes = [2, 32], strides = [1, 1]} : vector<2x128xf32> to vector<2x32xf32>
    %333 = arith.truncf %332 : vector<2x32xf32> to vector<2x32xbf16>
    %cst_160 = arith.constant dense<0.000000e+00> : vector<2x128xf32>
    %334 = tpu.matmul %333, %29, %cst_160 {dimension_numbers = #tpu.dot_dimension_numbers<[1], [0], [0], [1], [0, 0, 1, 1], [], []>} : vector<2x32xbf16>, vector<32x128xbf16>, vector<2x128xf32> -> vector<2x128xf32>
    %335 = vector.broadcast %45 : vector<1x128xf32> to vector<2x128xf32>
    %336 = arith.addf %334, %335 : vector<2x128xf32>
    %337 = vector.extract_strided_slice %336 {offsets = [0, 0], sizes = [2, 8], strides = [1, 1]} : vector<2x128xf32> to vector<2x8xf32>
    %338 = arith.truncf %337 : vector<2x8xf32> to vector<2x8xbf16>
    %cst_161 = arith.constant dense<0.000000e+00> : vector<2x128xf32>
    %339 = tpu.matmul %272, %30, %cst_161 {dimension_numbers = #tpu.dot_dimension_numbers<[1], [0], [0], [1], [0, 0, 1, 1], [], []>} : vector<2x8xbf16>, vector<8x128xbf16>, vector<2x128xf32> -> vector<2x128xf32>
    %cst_162 = arith.constant dense<0.000000e+00> : vector<2x128xf32>
    %340 = tpu.matmul %338, %31, %cst_162 {dimension_numbers = #tpu.dot_dimension_numbers<[1], [0], [0], [1], [0, 0, 1, 1], [], []>} : vector<2x8xbf16>, vector<8x128xbf16>, vector<2x128xf32> -> vector<2x128xf32>
    %341 = arith.addf %339, %340 : vector<2x128xf32>
    %342 = vector.broadcast %46 : vector<1x128xf32> to vector<2x128xf32>
    %343 = arith.addf %341, %342 : vector<2x128xf32>
    %cst_163 = arith.constant 0.000000e+00 : f32
    %344 = vector.broadcast %cst_163 : f32 to vector<2x128xf32>
    %345 = arith.maximumf %343, %344 : vector<2x128xf32>
    %346 = vector.extract_strided_slice %345 {offsets = [0, 0], sizes = [2, 32], strides = [1, 1]} : vector<2x128xf32> to vector<2x32xf32>
    %347 = arith.truncf %346 : vector<2x32xf32> to vector<2x32xbf16>
    %cst_164 = arith.constant dense<0.000000e+00> : vector<2x128xf32>
    %348 = tpu.matmul %347, %32, %cst_164 {dimension_numbers = #tpu.dot_dimension_numbers<[1], [0], [0], [1], [0, 0, 1, 1], [], []>} : vector<2x32xbf16>, vector<32x128xbf16>, vector<2x128xf32> -> vector<2x128xf32>
    %349 = vector.broadcast %47 : vector<1x128xf32> to vector<2x128xf32>
    %350 = arith.addf %348, %349 : vector<2x128xf32>
    %c1 = arith.constant 1 : index
    %c0_165 = arith.constant 0 : index
    %c0_166 = arith.constant 0 : index
    %351 = vector.load %arg14[%c1, %c0_165, %c0_166] : memref<2x2x128xf32, #tpu.memory_space<vmem>>, vector<1x2x128xf32>
    %352 = vector.shape_cast %351 : vector<1x2x128xf32> to vector<2x128xf32>
    %353 = vector.shape_cast %350 : vector<2x128xf32> to vector<1x2x128xf32>
    tpu.vector_store %arg14[%c1, %c0_165, %c0_166], %353 {strides = array<i32>} : memref<2x2x128xf32, #tpu.memory_space<vmem>>, vector<1x2x128xf32>,
    return
  }
}

</mosaic_0001>

<llo_original>
// kernel: tpu_custom_call.1
$region0: #{tpu_custom_call.1}
  #allocation0 [shape = 'u32[]', space=smem, size = 0x4, offset = 0x4, fixed_abs, tag = 'smem constant byte address 0x4 - core index']
  #allocation1 [shape = 'u32[72,128]{1,0:T(1,128)}', space=vmem, size = 0x9000, scoped, tag = 'internal scratch']
  %s0 = inlined_call_operand.vmem [shape: bf16[16,8], index: 0, kind: input, shape index: {}]
  %s1 = inlined_call_operand.vmem [shape: bf16[32,8], index: 1, kind: input, shape index: {}]
  %s2 = inlined_call_operand.vmem [shape: bf16[2,8], index: 2, kind: input, shape index: {}]
  %s3 = inlined_call_operand.vmem [shape: bf16[16,8], index: 3, kind: input, shape index: {}]
  %s4 = inlined_call_operand.vmem [shape: bf16[32,8], index: 4, kind: input, shape index: {}]
  %s5 = inlined_call_operand.vmem [shape: bf16[2,8], index: 5, kind: input, shape index: {}]
  %s6 = inlined_call_operand.vmem [shape: bf16[32,16], index: 6, kind: input, shape index: {}]
  %s7 = inlined_call_operand.vmem [shape: bf16[32,16], index: 7, kind: input, shape index: {}]
  %s8 = inlined_call_operand.vmem [shape: bf16[16,2], index: 8, kind: input, shape index: {}]
  %s9 = inlined_call_operand.vmem [shape: bf16[32,16], index: 9, kind: input, shape index: {}]
  %s10 = inlined_call_operand.vmem [shape: bf16[32,16], index: 10, kind: input, shape index: {}]
  %s11 = inlined_call_operand.vmem [shape: bf16[16,2], index: 11, kind: input, shape index: {}]
  %s12 = inlined_call_operand.hbm [shape: bf16[432,128], index: 12, kind: input, shape index: {}]
  %s13 = inlined_call_operand.vmem [shape: f32[16,128], index: 13, kind: input, shape index: {}]
  %s14 = inlined_call_operand.hbm [shape: f32[2,2,128], index: 14, kind: output, shape index: {}]
  %s15 = sld [smem:[#allocation0]]
  $region70: #{tpu_custom_call.1} parent=0
    _
  %s17 = ssub.s32 1, %s15
  %s18 = scalar_select 0, %s17, %s15
  $region1: #{tpu_custom_call.1} parent=0
    #allocation2 [shape = 'u8[110592]{0}', space=vmem, size = 0x1b000, scoped, tag = 'input window, operand 12, single buffered']
    #allocation3 [shape = 's32[1]{0}', space=sflag, size = 0x4, scoped, tag = 'scoped memory for tpu_custom_call.1']
    #allocation4 [shape = 's32[1]{0}', space=sflag, size = 0x4, scoped, tag = 'scoped memory for tpu_custom_call.1']
    #allocation5 [shape = 'u8[2048]{0}', space=vmem, size = 0x800, scoped, tag = 'output window, operand 0, single buffered']
    %19 = vsyncpa [#allocation3], 0
    %20 = vsyncpa [#allocation4], 0
    // Predicated region
    $region2: #{tpu_custom_call.1} parent=1 // pred_check
      _
    $region3: #{tpu_custom_call.1} parent=1 // pred_check_branch
      %22 = sbr.rel (0) target = $region5
    $region4: #{tpu_custom_call.1} parent=1 // pred_region
      _
    $region5: #{tpu_custom_call.1} parent=1 // pred_fallthru
      _
    // Predicated region
    $region6: #{tpu_custom_call.1} parent=1 // pred_check
      _
    $region7: #{tpu_custom_call.1} parent=1 // pred_check_branch
      %24 = sbr.rel (0) target = $region9
    $region8: #{tpu_custom_call.1} parent=1 // pred_region
      _
    $region9: #{tpu_custom_call.1} parent=1 // pred_fallthru
      _
    // Predicated region
    $region10: #{tpu_custom_call.1} parent=1 // pred_check
      _
    $region11: #{tpu_custom_call.1} parent=1 // pred_check_branch
      %26 = sbr.rel (0) target = $region13
    $region12: #{tpu_custom_call.1} parent=1 // pred_region
      _
    $region13: #{tpu_custom_call.1} parent=1 // pred_fallthru
      _
    // Predicated region
    $region14: #{tpu_custom_call.1} parent=1 // pred_check
      _
    $region15: #{tpu_custom_call.1} parent=1 // pred_check_branch
      %28 = sbr.rel (0) target = $region17
    $region16: #{tpu_custom_call.1} parent=1 // pred_region
      _
    $region17: #{tpu_custom_call.1} parent=1 // pred_fallthru
      _
    // Predicated region
    $region18: #{tpu_custom_call.1} parent=1 // pred_check
      _
    $region19: #{tpu_custom_call.1} parent=1 // pred_check_branch
      %30 = sbr.rel (0) target = $region21
    $region20: #{tpu_custom_call.1} parent=1 // pred_region
      _
    $region21: #{tpu_custom_call.1} parent=1 // pred_fallthru
      _
    // Predicated region
    $region22: #{tpu_custom_call.1} parent=1 // pred_check
      _
    $region23: #{tpu_custom_call.1} parent=1 // pred_check_branch
      %32 = sbr.rel (0) target = $region25
    $region24: #{tpu_custom_call.1} parent=1 // pred_region
      _
    $region25: #{tpu_custom_call.1} parent=1 // pred_fallthru
      _
    // Predicated region
    $region26: #{tpu_custom_call.1} parent=1 // pred_check
      _
    $region27: #{tpu_custom_call.1} parent=1 // pred_check_branch
      %34 = sbr.rel (0) target = $region29
    $region28: #{tpu_custom_call.1} parent=1 // pred_region
      _
    $region29: #{tpu_custom_call.1} parent=1 // pred_fallthru
      _
    // Predicated region
    $region30: #{tpu_custom_call.1} parent=1 // pred_check
      _
    $region31: #{tpu_custom_call.1} parent=1 // pred_check_branch
      %36 = sbr.rel (0) target = $region33
    $region32: #{tpu_custom_call.1} parent=1 // pred_region
      _
    $region33: #{tpu_custom_call.1} parent=1 // pred_fallthru
      _
    // Predicated region
    $region34: #{tpu_custom_call.1} parent=1 // pred_check
      _
    $region35: #{tpu_custom_call.1} parent=1 // pred_check_branch
      %38 = sbr.rel (0) target = $region37
    $region36: #{tpu_custom_call.1} parent=1 // pred_region
      _
    $region37: #{tpu_custom_call.1} parent=1 // pred_fallthru
      _
    // Predicated region
    $region38: #{tpu_custom_call.1} parent=1 // pred_check
      _
    $region39: #{tpu_custom_call.1} parent=1 // pred_check_branch
      %40 = sbr.rel (0) target = $region41
    $region40: #{tpu_custom_call.1} parent=1 // pred_region
      _
    $region41: #{tpu_custom_call.1} parent=1 // pred_fallthru
      _
    // Predicated region
    $region42: #{tpu_custom_call.1} parent=1 // pred_check
      _
    $region43: #{tpu_custom_call.1} parent=1 // pred_check_branch
      %42 = sbr.rel (0) target = $region45
    $region44: #{tpu_custom_call.1} parent=1 // pred_region
      _
    $region45: #{tpu_custom_call.1} parent=1 // pred_fallthru
      _
    // Predicated region
    $region46: #{tpu_custom_call.1} parent=1 // pred_check
      _
    $region47: #{tpu_custom_call.1} parent=1 // pred_check_branch
      %44 = sbr.rel (0) target = $region49
    $region48: #{tpu_custom_call.1} parent=1 // pred_region
      _
    $region49: #{tpu_custom_call.1} parent=1 // pred_fallthru
      _
    // Predicated region
    $region50: #{tpu_custom_call.1} parent=1 // pred_check
      _
    $region51: #{tpu_custom_call.1} parent=1 // pred_check_branch
      %46 = sbr.rel (0) target = $region53
    $region52: #{tpu_custom_call.1} parent=1 // pred_region
      %48 = vsyncadd [#allocation3], 0
      %s49 = sshll.u32 %s12, 4
      %s50 = int_to_ptr.hbm [resolvable:$true] %s49
      %s51 = sshll.u32 [#allocation2], 4
      %s52 = int_to_ptr.vmem [resolvable:$true] %s51
      %57 = dma.hbm_to_vmem [thread:$0]  %s50, 3456, %s52, [#allocation3], 64, 64, 4
    $region53: #{tpu_custom_call.1} parent=1 // pred_fallthru
      _
    // Predicated region
    $region54: #{tpu_custom_call.1} parent=1 // pred_check
      _
    $region55: #{tpu_custom_call.1} parent=1 // pred_check_branch
      %59 = sbr.rel (0) target = $region57
    $region56: #{tpu_custom_call.1} parent=1 // pred_region
      _
    $region57: #{tpu_custom_call.1} parent=1 // pred_fallthru
      _
    // Predicated region
    $region58: #{tpu_custom_call.1} parent=1 // pred_check
      _
    $region59: #{tpu_custom_call.1} parent=1 // pred_check_branch
      %61 = sbr.rel (0) target = $region61
    $region60: #{tpu_custom_call.1} parent=1 // pred_region
      %63 = dma.done [#allocation3], 3456
    $region61: #{tpu_custom_call.1} parent=1 // pred_fallthru
      _
    %v65 = vld [vmem:[#allocation2] sm:$0xf]
    %v66 = vld [vmem:[#allocation2 + $0x4] sm:$0xf]
    %v67 = vld [vmem:[#allocation2 + $0x8] sm:$0xf]
    %v68 = vld [vmem:[#allocation2 + $0xc] sm:$0xf]
    %v69 = vld [vmem:[#allocation2 + $0x10] sm:$0xf]
    %v70 = vld [vmem:[#allocation2 + $0x14] sm:$0xf]
    %v71 = vld [vmem:[#allocation2 + $0x18] sm:$0xf]
    %v72 = vld [vmem:[#allocation2 + $0x1c] sm:$0xf]
    %v73 = vld [vmem:[#allocation2 + $0x20] sm:$0xf]
    %v74 = vld [vmem:[#allocation2 + $0x24] sm:$0xf]
    %v75 = vld [vmem:[#allocation2 + $0x28] sm:$0xf]
    %v76 = vld [vmem:[#allocation2 + $0x2c] sm:$0xf]
    %v77 = vld [vmem:[#allocation2 + $0x30] sm:$0xf]
    %v78 = vld [vmem:[#allocation2 + $0x34] sm:$0xf]
    %v79 = vld [vmem:[#allocation2 + $0x38] sm:$0xf]
    %v80 = vld [vmem:[#allocation2 + $0x3c] sm:$0xf]
    %v81 = vld [vmem:[#allocation2 + $0x40] sm:$0xf]
    %v82 = vld [vmem:[#allocation2 + $0x44] sm:$0xf]
    %v83 = vld [vmem:[#allocation2 + $0x48] sm:$0xf]
    %v84 = vld [vmem:[#allocation2 + $0x4c] sm:$0xf]
    %v85 = vld [vmem:[#allocation2 + $0x50] sm:$0xf]
    %v86 = vld [vmem:[#allocation2 + $0x54] sm:$0xf]
    %v87 = vld [vmem:[#allocation2 + $0x58] sm:$0xf]
    %v88 = vld [vmem:[#allocation2 + $0x5c] sm:$0xf]
    %v89 = vld [vmem:[#allocation2 + $0x60] sm:$0xf]
    %v90 = vld [vmem:[#allocation2 + $0x64] sm:$0xf]
    %v91 = vld [vmem:[#allocation2 + $0x68] sm:$0xf]
    %v92 = vld [vmem:[#allocation2 + $0x6c] sm:$0xf]
    %v93 = vld [vmem:[#allocation2 + $0x70] sm:$0xf]
    %v94 = vld [vmem:[#allocation2 + $0x74] sm:$0xf]
    %v95 = vld [vmem:[#allocation2 + $0x78] sm:$0xf]
    %v96 = vld [vmem:[#allocation2 + $0x7c] sm:$0xf]
    %v97 = vld [vmem:[#allocation2 + $0x80] sm:$0xf]
    %v98 = vld [vmem:[#allocation2 + $0x84] sm:$0xf]
    %v99 = vld [vmem:[#allocation2 + $0x88] sm:$0xf]
    %v100 = vld [vmem:[#allocation2 + $0x8c] sm:$0xf]
    %v101 = vld [vmem:[#allocation2 + $0x90] sm:$0xf]
    %v102 = vld [vmem:[#allocation2 + $0x94] sm:$0xf]
    %v103 = vld [vmem:[#allocation2 + $0x98] sm:$0xf]
    %v104 = vld [vmem:[#allocation2 + $0x9c] sm:$0xf]
    %v105 = vld [vmem:[#allocation2 + $0xa0] sm:$0xf]
    %v106 = vld [vmem:[#allocation2 + $0xa4] sm:$0xf]
    %v107 = vld [vmem:[#allocation2 + $0xa8] sm:$0xf]
    %v108 = vld [vmem:[#allocation2 + $0xac] sm:$0xf]
    %v109 = vld [vmem:[#allocation2 + $0xb0] sm:$0xf]
    %v110 = vld [vmem:[#allocation2 + $0xb4] sm:$0xf]
    %v111 = vld [vmem:[#allocation2 + $0xb8] sm:$0xf]
    %v112 = vld [vmem:[#allocation2 + $0xbc] sm:$0xf]
    %v113 = vld [vmem:[#allocation2 + $0xc0] sm:$0xf]
    %v114 = vld [vmem:[#allocation2 + $0xc4] sm:$0xf]
    %v115 = vld [vmem:[#allocation2 + $0xc8] sm:$0xf]
    %v116 = vld [vmem:[#allocation2 + $0xcc] sm:$0xf]
    %v117 = vld [vmem:[#allocation2 + $0xd0] sm:$0xf]
    %v118 = vld [vmem:[#allocation2 + $0xd4] sm:$0xf]
    %v119 = vld [vmem:[%s13] sm:$0xff]
    %v120 = vld [vmem:[%s13 + $0x8] sm:$0xff]
    %v121 = vld [vmem:[%s0] sm:$0xf]
    %v122 = vld [vmem:[%s0 + $0x4] sm:$0xf]
    %v123 = vld [vmem:[%s1] sm:$0xf]
    %v124 = vld [vmem:[%s1 + $0x4] sm:$0xf]
    %v125 = vld [vmem:[%s1 + $0x8] sm:$0xf]
    %v126 = vld [vmem:[%s1 + $0xc] sm:$0xf]
    %v127 = vld [vmem:[%s2] sm:$0x1]
    %v128 = vld [vmem:[%s3] sm:$0xf]
    %v129 = vld [vmem:[%s3 + $0x4] sm:$0xf]
    %v130 = vld [vmem:[%s4] sm:$0xf]
    %v131 = vld [vmem:[%s4 + $0x4] sm:$0xf]
    %v132 = vld [vmem:[%s4 + $0x8] sm:$0xf]
    %v133 = vld [vmem:[%s4 + $0xc] sm:$0xf]
    %v134 = vld [vmem:[%s5] sm:$0x1]
    %v135 = vld [vmem:[%s6] sm:$0xf]
    %v136 = vld [vmem:[%s6 + $0x4] sm:$0xf]
    %v137 = vld [vmem:[%s6 + $0x8] sm:$0xf]
    %v138 = vld [vmem:[%s6 + $0xc] sm:$0xf]
    %v139 = vld [vmem:[%s7] sm:$0xf]
    %v140 = vld [vmem:[%s7 + $0x4] sm:$0xf]
    %v141 = vld [vmem:[%s7 + $0x8] sm:$0xf]
    %v142 = vld [vmem:[%s7 + $0xc] sm:$0xf]
    %v143 = vld [vmem:[%s8] sm:$0xf]
    %v144 = vld [vmem:[%s8 + $0x4] sm:$0xf]
    %v145 = vld [vmem:[%s9] sm:$0xf]
    %v146 = vld [vmem:[%s9 + $0x4] sm:$0xf]
    %v147 = vld [vmem:[%s9 + $0x8] sm:$0xf]
    %v148 = vld [vmem:[%s9 + $0xc] sm:$0xf]
    %v149 = vld [vmem:[%s10] sm:$0xf]
    %v150 = vld [vmem:[%s10 + $0x4] sm:$0xf]
    %v151 = vld [vmem:[%s10 + $0x8] sm:$0xf]
    %v152 = vld [vmem:[%s10 + $0xc] sm:$0xf]
    %v153 = vld [vmem:[%s11] sm:$0xf]
    %v154 = vld [vmem:[%s11 + $0x4] sm:$0xf]
    %vm155 = vcmask 64512
    %v157 = vsel %vm155, %v134, 0
    %vm159 = vcmask 1043456
    %v161 = vsel %vm159, %v69, 0
    %163 = vmatpush.bf16.msra.mxu0 0
    %164 = vmatpush.bf16.msra.mxu0 0
    %165 = vmatpush.bf16.msra.mxu0 0
    %166 = vmatpush.bf16.msra.mxu0 0
    %167 = vmatpush.bf16.msra.mxu0 0
    %168 = vmatpush.bf16.msra.mxu0 0
    %169 = vmatpush.bf16.msra.mxu0 0
    %170 = vmatpush.bf16.msra.mxu0 %v161
    %171 = vmatmul.bf16.gmra.mxu0 %v157
    %v172 = vpop.f32.mrf.mxu0
    %v173 = vadd.f32 0.0, %v172
    %v174 = vpop.f32.mrf.mxu0
    %175 = vdwg.mxu0
    %v177 = vsel %vm155, %v127, 0
    %v180 = vsel %vm159, %v68, 0
    %182 = vmatpush.bf16.msra.mxu0 0
    %183 = vmatpush.bf16.msra.mxu0 0
    %184 = vmatpush.bf16.msra.mxu0 0
    %185 = vmatpush.bf16.msra.mxu0 0
    %186 = vmatpush.bf16.msra.mxu0 0
    %187 = vmatpush.bf16.msra.mxu0 0
    %188 = vmatpush.bf16.msra.mxu0 0
    %189 = vmatpush.bf16.msra.mxu0 %v180
    %190 = vmatmul.bf16.gmra.mxu0 %v177
    %v191 = vpop.f32.mrf.mxu0
    %v192 = vadd.f32 %v173, %v191
    %v193 = vpop.f32.mrf.mxu0
    %194 = vdwg.mxu0
    %v195 = vpack.c.bf16 %v192, %v192
    %v198 = vunpack.c.l.b16 %v143
    %v199 = vunpack.c.l.b16 %v144
    %v200 = vpack.c.b16 %v199, %v198
    %vm201 = vcmask 15360
    %v203 = vsel %vm201, %v200, 0
    %vm205 = vcmask 1040384
    %v207 = vsel %vm205, %v195, 0
    %209 = vmatpush.bf16.msra.mxu0 0
    %210 = vmatpush.bf16.msra.mxu0 0
    %211 = vmatpush.bf16.msra.mxu0 0
    %212 = vmatpush.bf16.msra.mxu0 0
    %213 = vmatpush.bf16.msra.mxu0 0
    %214 = vmatpush.bf16.msra.mxu0 0
    %215 = vmatpush.bf16.msra.mxu0 0
    %216 = vmatpush.bf16.msra.mxu0 %v207
    %217 = vmatmul.bf16.gmra.mxu0 %v203
    %v218 = vpop.f32.mrf.mxu0
    %v219 = vadd.f32 0.0, %v218
    %v220 = vpop.f32.mrf.mxu0
    %v221 = vadd.f32 0.0, %v220
    %222 = vdwg.mxu0
    %v225 = vunpack.c.l.b16 %v121
    %v226 = vunpack.c.l.b16 %v122
    %v227 = vpack.c.b16 %v226, %v225
    %v229 = vsel %vm155, %v227, 0
    %v232 = vsel %vm159, %v66, 0
    %234 = vmatpush.bf16.msra.mxu0 0
    %235 = vmatpush.bf16.msra.mxu0 0
    %236 = vmatpush.bf16.msra.mxu0 0
    %237 = vmatpush.bf16.msra.mxu0 0
    %238 = vmatpush.bf16.msra.mxu0 0
    %239 = vmatpush.bf16.msra.mxu0 0
    %240 = vmatpush.bf16.msra.mxu0 0
    %241 = vmatpush.bf16.msra.mxu0 %v232
    %242 = vmatmul.bf16.gmra.mxu0 %v229
    %v243 = vpop.f32.mrf.mxu0
    %v244 = vadd.f32 0.0, %v243
    %v245 = vpop.f32.mrf.mxu0
    %v246 = vadd.f32 0.0, %v245
    %247 = vdwg.mxu0
    %v249 = vsel %vm159, %v65, 0
    %251 = vmatpush.bf16.msra.mxu0 0
    %252 = vmatpush.bf16.msra.mxu0 0
    %253 = vmatpush.bf16.msra.mxu0 0
    %254 = vmatpush.bf16.msra.mxu0 0
    %255 = vmatpush.bf16.msra.mxu0 0
    %256 = vmatpush.bf16.msra.mxu0 0
    %257 = vmatpush.bf16.msra.mxu0 0
    %258 = vmatpush.bf16.msra.mxu0 %v249
    %259 = vmatmul.bf16.gmra.mxu0 %v229
    %v260 = vpop.f32.mrf.mxu0
    %v261 = vadd.f32 %v219, %v260
    %v262 = vpop.f32.mrf.mxu0
    %v263 = vadd.f32 %v221, %v262
    %264 = vdwg.mxu0
    %v265 = vpack.c.bf16 %v263, %v261
    %v266 = vpack.c.bf16 %v246, %v244
    %v271 = vunpack.c.l.b16 %v139
    %v272 = vunpack.c.l.b16 %v140
    %v273 = vunpack.c.l.b16 %v141
    %v274 = vunpack.c.l.b16 %v142
    %v275 = vpack.c.b16 %v272, %v271
    %v276 = vpack.c.b16 %v274, %v273
    %vm277 = vcmask 130048
    %v279 = vsel %vm277, %v275, 0
    %v282 = vsel %vm277, %v276, 0
    %284 = vmatpush.bf16.msra.mxu0 0
    %285 = vmatpush.bf16.msra.mxu0 0
    %286 = vmatpush.bf16.msra.mxu0 0
    %287 = vmatpush.bf16.msra.mxu0 0
    %288 = vmatpush.bf16.msra.mxu0 0
    %289 = vmatpush.bf16.msra.mxu0 0
    %290 = vmatpush.bf16.msra.mxu0 0
    %291 = vmatpush.bf16.msra.mxu0 %v266
    %292 = vmatmul.bf16.gmra.mxu0 %v279
    %v293 = vpop.f32.mrf.mxu0
    %v294 = vadd.f32 0.0, %v293
    %v295 = vpop.f32.mrf.mxu0
    %v296 = vadd.f32 0.0, %v295
    %297 = vmatmul.bf16.gmra.mxu0 %v282
    %v298 = vpop.f32.mrf.mxu0
    %v299 = vadd.f32 0.0, %v298
    %v300 = vpop.f32.mrf.mxu0
    %v301 = vadd.f32 0.0, %v300
    %302 = vdwg.mxu0
    %v307 = vunpack.c.l.b16 %v135
    %v308 = vunpack.c.l.b16 %v136
    %v309 = vunpack.c.l.b16 %v137
    %v310 = vunpack.c.l.b16 %v138
    %v311 = vpack.c.b16 %v308, %v307
    %v312 = vpack.c.b16 %v310, %v309
    %v314 = vsel %vm277, %v311, 0
    %v317 = vsel %vm277, %v312, 0
    %319 = vmatpush.bf16.msra.mxu0 0
    %320 = vmatpush.bf16.msra.mxu0 0
    %321 = vmatpush.bf16.msra.mxu0 0
    %322 = vmatpush.bf16.msra.mxu0 0
    %323 = vmatpush.bf16.msra.mxu0 0
    %324 = vmatpush.bf16.msra.mxu0 0
    %325 = vmatpush.bf16.msra.mxu0 0
    %326 = vmatpush.bf16.msra.mxu0 %v265
    %327 = vmatmul.bf16.gmra.mxu0 %v314
    %v328 = vpop.f32.mrf.mxu0
    %v329 = vadd.f32 %v294, %v328
    %v330 = vpop.f32.mrf.mxu0
    %v331 = vadd.f32 %v296, %v330
    %332 = vmatmul.bf16.gmra.mxu0 %v317
    %v333 = vpop.f32.mrf.mxu0
    %v334 = vadd.f32 %v299, %v333
    %v335 = vpop.f32.mrf.mxu0
    %v336 = vadd.f32 %v301, %v335
    %337 = vdwg.mxu0
    %v342 = vunpack.c.l.b16 %v123
    %v343 = vunpack.c.l.b16 %v124
    %v344 = vunpack.c.l.b16 %v125
    %v345 = vunpack.c.l.b16 %v126
    %v346 = vpack.c.b16 %v343, %v342
    %v347 = vpack.c.b16 %v345, %v344
    %v349 = vsel %vm155, %v346, 0
    %v352 = vsel %vm155, %v347, 0
    %v355 = vsel %vm159, %v67, 0
    %357 = vmatpush.bf16.msra.mxu0 0
    %358 = vmatpush.bf16.msra.mxu0 0
    %359 = vmatpush.bf16.msra.mxu0 0
    %360 = vmatpush.bf16.msra.mxu0 0
    %361 = vmatpush.bf16.msra.mxu0 0
    %362 = vmatpush.bf16.msra.mxu0 0
    %363 = vmatpush.bf16.msra.mxu0 0
    %364 = vmatpush.bf16.msra.mxu0 %v355
    %365 = vmatmul.bf16.gmra.mxu0 %v349
    %v366 = vpop.f32.mrf.mxu0
    %v367 = vadd.f32 0.0, %v366
    %v368 = vpop.f32.mrf.mxu0
    %v369 = vadd.f32 0.0, %v368
    %370 = vmatmul.bf16.gmra.mxu0 %v352
    %v371 = vpop.f32.mrf.mxu0
    %v372 = vadd.f32 0.0, %v371
    %v373 = vpop.f32.mrf.mxu0
    %v374 = vadd.f32 0.0, %v373
    %375 = vdwg.mxu0
    %v376 = vadd.f32 %v329, %v367
    %v377 = vadd.f32 %v331, %v369
    %v378 = vadd.f32 %v334, %v372
    %v379 = vadd.f32 %v336, %v374
    %v380 = vperm.slane %v119, 0
    %v381 = vadd.f32 %v376, %v380
    %v382 = vadd.f32 %v377, %v380
    %v383 = vadd.f32 %v378, %v380
    %v384 = vadd.f32 %v379, %v380
    %v385 = vmax.f32 %v381, 0.0
    %v386 = vmax.f32 %v382, 0.0
    %v387 = vmax.f32 %v383, 0.0
    %v388 = vmax.f32 %v384, 0.0
    %v389 = vpack.c.bf16 %v386, %v385
    %v390 = vpack.c.bf16 %v388, %v387
    %v391 = vperm.slane %v119, 1
    %v396 = vunpack.c.l.b16 %v70
    %v397 = vunpack.c.l.b16 %v71
    %v398 = vunpack.c.l.b16 %v72
    %v399 = vunpack.c.l.b16 %v73
    %v400 = vpack.c.b16 %v397, %v396
    %v401 = vpack.c.b16 %v399, %v398
    %vm404 = vcmask 261120
    %v406 = vsel %vm404, %v389, 0
    %v409 = vsel %vm404, %v390, 0
    %411 = vmatpush.bf16.msra.mxu0 0
    %412 = vmatpush.bf16.msra.mxu0 0
    %413 = vmatpush.bf16.msra.mxu0 0
    %414 = vmatpush.bf16.msra.mxu0 0
    %415 = vmatpush.bf16.msra.mxu0 0
    %416 = vmatpush.bf16.msra.mxu0 0
    %417 = vmatpush.bf16.msra.mxu0 %v401
    %418 = vmatpush.bf16.msra.mxu0 %v400
    %419 = vmatmul.bf16.gmra.mxu0 %v406
    %v420 = vpop.f32.mrf.mxu0
    %v421 = vadd.f32 %v391, %v420
    %v422 = vpop.f32.mrf.mxu0
    %v423 = vadd.f32 %v391, %v422
    %424 = vmatmul.bf16.gmra.mxu0 %v409
    %v425 = vpop.f32.mrf.mxu0
    %v426 = vadd.f32 %v391, %v425
    %v427 = vpop.f32.mrf.mxu0
    %v428 = vadd.f32 %v391, %v427
    %429 = vdwg.mxu0
    %v430 = vpack.c.bf16 %v423, %v421
    %v431 = vpack.c.bf16 %v428, %v426
    %434 = vxpose.xlu0.c.b16.start [1/8] %v275, 128
    %435 = vxpose.xlu0.c.b16.cont [2/8] %v276, 128
    %436 = vxpose.xlu0.c.b16.cont [3/8] 0, 128
    %437 = vxpose.xlu0.c.b16.cont [4/8] 0, 128
    %438 = vxpose.xlu0.c.b16.cont [5/8] 0, 128
    %439 = vxpose.xlu0.c.b16.cont [6/8] 0, 128
    %440 = vxpose.xlu0.c.b16.cont [7/8] 0, 128
    %441 = vxpose.xlu0.c.b16.end [8/8] 0, 128
    %v442 = vpop.trf.xlu0
    %v443 = vpop.trf.xlu0
    %v444 = vpop.trf.xlu0
    %v445 = vpop.trf.xlu0
    %v446 = vpop.trf.xlu0
    %v447 = vpop.trf.xlu0
    %v448 = vpop.trf.xlu0
    %v449 = vpop.trf.xlu0
    %v451 = vsel %vm404, %v442, 0
    %453 = vmatpush.bf16.msra.mxu0 0
    %454 = vmatpush.bf16.msra.mxu0 0
    %455 = vmatpush.bf16.msra.mxu0 0
    %456 = vmatpush.bf16.msra.mxu0 0
    %457 = vmatpush.bf16.msra.mxu0 0
    %458 = vmatpush.bf16.msra.mxu0 0
    %459 = vmatpush.bf16.msra.mxu0 %v431
    %460 = vmatpush.bf16.msra.mxu0 %v430
    %461 = vmatmul.bf16.gmra.mxu0 %v451
    %v462 = vpop.f32.mrf.mxu0
    %v463 = vadd.f32 0.0, %v462
    %v464 = vpop.f32.mrf.mxu0
    %v465 = vadd.f32 0.0, %v464
    %466 = vdwg.mxu0
    %v467 = vpack.c.bf16 %v465, %v463
    %v469 = vsel %vm159, %v77, 0
    %471 = vmatpush.bf16.msra.mxu0 0
    %472 = vmatpush.bf16.msra.mxu0 0
    %473 = vmatpush.bf16.msra.mxu0 0
    %474 = vmatpush.bf16.msra.mxu0 0
    %475 = vmatpush.bf16.msra.mxu0 0
    %476 = vmatpush.bf16.msra.mxu0 0
    %477 = vmatpush.bf16.msra.mxu0 0
    %478 = vmatpush.bf16.msra.mxu0 %v469
    %479 = vmatmul.bf16.gmra.mxu0 %v157
    %v480 = vpop.f32.mrf.mxu0
    %v481 = vadd.f32 0.0, %v480
    %v482 = vpop.f32.mrf.mxu0
    %483 = vdwg.mxu0
    %v485 = vsel %vm159, %v76, 0
    %487 = vmatpush.bf16.msra.mxu0 0
    %488 = vmatpush.bf16.msra.mxu0 0
    %489 = vmatpush.bf16.msra.mxu0 0
    %490 = vmatpush.bf16.msra.mxu0 0
    %491 = vmatpush.bf16.msra.mxu0 0
    %492 = vmatpush.bf16.msra.mxu0 0
    %493 = vmatpush.bf16.msra.mxu0 0
    %494 = vmatpush.bf16.msra.mxu0 %v485
    %495 = vmatmul.bf16.gmra.mxu0 %v177
    %v496 = vpop.f32.mrf.mxu0
    %v497 = vadd.f32 %v481, %v496
    %v498 = vpop.f32.mrf.mxu0
    %499 = vdwg.mxu0
    %v501 = vsel %vm155, %v467, 0
    %v504 = vsel %vm159, %v75, 0
    %506 = vmatpush.bf16.msra.mxu0 0
    %507 = vmatpush.bf16.msra.mxu0 0
    %508 = vmatpush.bf16.msra.mxu0 0
    %509 = vmatpush.bf16.msra.mxu0 0
    %510 = vmatpush.bf16.msra.mxu0 0
    %511 = vmatpush.bf16.msra.mxu0 0
    %512 = vmatpush.bf16.msra.mxu0 0
    %513 = vmatpush.bf16.msra.mxu0 %v504
    %514 = vmatmul.bf16.gmra.mxu0 %v501
    %v515 = vpop.f32.mrf.mxu0
    %v516 = vadd.f32 0.0, %v515
    %v517 = vpop.f32.mrf.mxu0
    %v518 = vadd.f32 0.0, %v517
    %519 = vdwg.mxu0
    %v521 = vsel %vm159, %v74, 0
    %523 = vmatpush.bf16.msra.mxu0 0
    %524 = vmatpush.bf16.msra.mxu0 0
    %525 = vmatpush.bf16.msra.mxu0 0
    %526 = vmatpush.bf16.msra.mxu0 0
    %527 = vmatpush.bf16.msra.mxu0 0
    %528 = vmatpush.bf16.msra.mxu0 0
    %529 = vmatpush.bf16.msra.mxu0 0
    %530 = vmatpush.bf16.msra.mxu0 %v521
    %531 = vmatmul.bf16.gmra.mxu0 %v229
    %v532 = vpop.f32.mrf.mxu0
    %v533 = vadd.f32 %v516, %v532
    %v534 = vpop.f32.mrf.mxu0
    %v535 = vadd.f32 %v518, %v534
    %536 = vdwg.mxu0
    %v537 = vpack.c.bf16 %v497, %v497
    %v539 = vsel %vm205, %v537, 0
    %541 = vmatpush.bf16.msra.mxu0 0
    %542 = vmatpush.bf16.msra.mxu0 0
    %543 = vmatpush.bf16.msra.mxu0 0
    %544 = vmatpush.bf16.msra.mxu0 0
    %545 = vmatpush.bf16.msra.mxu0 0
    %546 = vmatpush.bf16.msra.mxu0 0
    %547 = vmatpush.bf16.msra.mxu0 0
    %548 = vmatpush.bf16.msra.mxu0 %v539
    %549 = vmatmul.bf16.gmra.mxu0 %v203
    %v550 = vpop.f32.mrf.mxu0
    %v551 = vadd.f32 0.0, %v550
    %v552 = vpop.f32.mrf.mxu0
    %v553 = vadd.f32 0.0, %v552
    %554 = vdwg.mxu0
    %v555 = vadd.f32 %v533, %v551
    %v556 = vadd.f32 %v535, %v553
    %v557 = vperm.slane %v119, 2
    %v558 = vadd.f32 %v555, %v557
    %v559 = vadd.f32 %v556, %v557
    %v560 = vmax.f32 %v558, 0.0
    %v561 = vmax.f32 %v559, 0.0
    %v562 = vpack.c.bf16 %v561, %v560
    %v563 = vperm.slane %v119, 3
    %v568 = vunpack.c.l.b16 %v78
    %v569 = vunpack.c.l.b16 %v79
    %v570 = vunpack.c.l.b16 %v80
    %v571 = vunpack.c.l.b16 %v81
    %v572 = vpack.c.b16 %v569, %v568
    %v573 = vpack.c.b16 %v571, %v570
    %v577 = vsel %vm404, %v562, 0
    %579 = vmatpush.bf16.msra.mxu0 0
    %580 = vmatpush.bf16.msra.mxu0 0
    %581 = vmatpush.bf16.msra.mxu0 0
    %582 = vmatpush.bf16.msra.mxu0 0
    %583 = vmatpush.bf16.msra.mxu0 0
    %584 = vmatpush.bf16.msra.mxu0 0
    %585 = vmatpush.bf16.msra.mxu0 %v573
    %586 = vmatpush.bf16.msra.mxu0 %v572
    %587 = vmatmul.bf16.gmra.mxu0 %v577
    %v588 = vpop.f32.mrf.mxu0
    %v589 = vadd.f32 %v563, %v588
    %v590 = vpop.f32.mrf.mxu0
    %v591 = vadd.f32 %v563, %v590
    %592 = vdwg.mxu0
    %v593 = vpack.c.bf16 %v591, %v589
    %595 = vxpose.xlu0.c.b16.start [1/8] %v200, 128
    %596 = vxpose.xlu0.c.b16.cont [2/8] 0, 128
    %597 = vxpose.xlu0.c.b16.cont [3/8] 0, 128
    %598 = vxpose.xlu0.c.b16.cont [4/8] 0, 128
    %599 = vxpose.xlu0.c.b16.cont [5/8] 0, 128
    %600 = vxpose.xlu0.c.b16.cont [6/8] 0, 128
    %601 = vxpose.xlu0.c.b16.cont [7/8] 0, 128
    %602 = vxpose.xlu0.c.b16.end [8/8] 0, 128
    %v603 = vpop.trf.xlu0
    %v604 = vpop.trf.xlu0
    %v605 = vpop.trf.xlu0
    %v606 = vpop.trf.xlu0
    %v607 = vpop.trf.xlu0
    %v608 = vpop.trf.xlu0
    %v609 = vpop.trf.xlu0
    %v610 = vpop.trf.xlu0
    %v612 = vsel %vm277, %v603, 0
    %614 = vmatpush.bf16.msra.mxu0 0
    %615 = vmatpush.bf16.msra.mxu0 0
    %616 = vmatpush.bf16.msra.mxu0 0
    %617 = vmatpush.bf16.msra.mxu0 0
    %618 = vmatpush.bf16.msra.mxu0 0
    %619 = vmatpush.bf16.msra.mxu0 0
    %620 = vmatpush.bf16.msra.mxu0 0
    %621 = vmatpush.bf16.msra.mxu0 %v593
    %622 = vmatmul.bf16.gmra.mxu0 %v612
    %v623 = vpop.f32.mrf.mxu0
    %v624 = vadd.f32 0.0, %v623
    %v625 = vpop.f32.mrf.mxu0
    %626 = vdwg.mxu0
    %v627 = vpack.c.bf16 %v624, %v624
    %v629 = vsel %vm159, %v83, 0
    %631 = vmatpush.bf16.msra.mxu0 0
    %632 = vmatpush.bf16.msra.mxu0 0
    %633 = vmatpush.bf16.msra.mxu0 0
    %634 = vmatpush.bf16.msra.mxu0 0
    %635 = vmatpush.bf16.msra.mxu0 0
    %636 = vmatpush.bf16.msra.mxu0 0
    %637 = vmatpush.bf16.msra.mxu0 0
    %638 = vmatpush.bf16.msra.mxu0 %v629
    %639 = vmatmul.bf16.gmra.mxu0 %v177
    %v640 = vpop.f32.mrf.mxu0
    %v641 = vadd.f32 0.0, %v640
    %v642 = vpop.f32.mrf.mxu0
    %643 = vdwg.mxu0
    %v645 = vsel %vm155, %v627, 0
    %v648 = vsel %vm159, %v82, 0
    %650 = vmatpush.bf16.msra.mxu0 0
    %651 = vmatpush.bf16.msra.mxu0 0
    %652 = vmatpush.bf16.msra.mxu0 0
    %653 = vmatpush.bf16.msra.mxu0 0
    %654 = vmatpush.bf16.msra.mxu0 0
    %655 = vmatpush.bf16.msra.mxu0 0
    %656 = vmatpush.bf16.msra.mxu0 0
    %657 = vmatpush.bf16.msra.mxu0 %v648
    %658 = vmatmul.bf16.gmra.mxu0 %v645
    %v659 = vpop.f32.mrf.mxu0
    %v660 = vadd.f32 %v641, %v659
    %v661 = vpop.f32.mrf.mxu0
    %662 = vdwg.mxu0
    %v664 = vsel %vm159, %v84, 0
    %666 = vmatpush.bf16.msra.mxu0 0
    %667 = vmatpush.bf16.msra.mxu0 0
    %668 = vmatpush.bf16.msra.mxu0 0
    %669 = vmatpush.bf16.msra.mxu0 0
    %670 = vmatpush.bf16.msra.mxu0 0
    %671 = vmatpush.bf16.msra.mxu0 0
    %672 = vmatpush.bf16.msra.mxu0 0
    %673 = vmatpush.bf16.msra.mxu0 %v664
    %674 = vmatmul.bf16.gmra.mxu0 %v157
    %v675 = vpop.f32.mrf.mxu0
    %v676 = vadd.f32 0.0, %v675
    %v677 = vpop.f32.mrf.mxu0
    %678 = vdwg.mxu0
    %v679 = vadd.f32 %v660, %v676
    %v680 = vperm.slane %v119, 4
    %v681 = vadd.f32 %v679, %v680
    %v682 = vmax.f32 %v681, 0.0
    %v683 = vpack.c.bf16 %v682, %v682
    %v684 = vperm.slane %v119, 5
    %v689 = vunpack.c.l.b16 %v85
    %v690 = vunpack.c.l.b16 %v86
    %v691 = vunpack.c.l.b16 %v87
    %v692 = vunpack.c.l.b16 %v88
    %v693 = vpack.c.b16 %v690, %v689
    %v694 = vpack.c.b16 %v692, %v691
    %v698 = vsel %vm404, %v683, 0
    %700 = vmatpush.bf16.msra.mxu0 0
    %701 = vmatpush.bf16.msra.mxu0 0
    %702 = vmatpush.bf16.msra.mxu0 0
    %703 = vmatpush.bf16.msra.mxu0 0
    %704 = vmatpush.bf16.msra.mxu0 0
    %705 = vmatpush.bf16.msra.mxu0 0
    %706 = vmatpush.bf16.msra.mxu0 %v694
    %707 = vmatpush.bf16.msra.mxu0 %v693
    %708 = vmatmul.bf16.gmra.mxu0 %v698
    %v709 = vpop.f32.mrf.mxu0
    %v710 = vadd.f32 %v684, %v709
    %v711 = vpop.f32.mrf.mxu0
    %712 = vdwg.mxu0
    %v713 = vpack.c.bf16 %v710, %v710
    %v715 = vsel %vm155, %v713, 0
    %v718 = vsel %vm159, %v93, 0
    %720 = vmatpush.bf16.msra.mxu0 0
    %721 = vmatpush.bf16.msra.mxu0 0
    %722 = vmatpush.bf16.msra.mxu0 0
    %723 = vmatpush.bf16.msra.mxu0 0
    %724 = vmatpush.bf16.msra.mxu0 0
    %725 = vmatpush.bf16.msra.mxu0 0
    %726 = vmatpush.bf16.msra.mxu0 0
    %727 = vmatpush.bf16.msra.mxu0 %v718
    %728 = vmatmul.bf16.gmra.mxu0 %v715
    %v729 = vpop.f32.mrf.mxu0
    %v730 = vadd.f32 0.0, %v729
    %v731 = vpop.f32.mrf.mxu0
    %732 = vdwg.mxu0
    %v734 = vsel %vm159, %v92, 0
    %736 = vmatpush.bf16.msra.mxu0 0
    %737 = vmatpush.bf16.msra.mxu0 0
    %738 = vmatpush.bf16.msra.mxu0 0
    %739 = vmatpush.bf16.msra.mxu0 0
    %740 = vmatpush.bf16.msra.mxu0 0
    %741 = vmatpush.bf16.msra.mxu0 0
    %742 = vmatpush.bf16.msra.mxu0 0
    %743 = vmatpush.bf16.msra.mxu0 %v734
    %744 = vmatmul.bf16.gmra.mxu0 %v157
    %v745 = vpop.f32.mrf.mxu0
    %v746 = vadd.f32 %v730, %v745
    %v747 = vpop.f32.mrf.mxu0
    %748 = vdwg.mxu0
    %v749 = vpack.c.bf16 %v746, %v746
    %v752 = vunpack.c.l.b16 %v153
    %v753 = vunpack.c.l.b16 %v154
    %v754 = vpack.c.b16 %v753, %v752
    %v756 = vsel %vm201, %v754, 0
    %v759 = vsel %vm205, %v749, 0
    %761 = vmatpush.bf16.msra.mxu0 0
    %762 = vmatpush.bf16.msra.mxu0 0
    %763 = vmatpush.bf16.msra.mxu0 0
    %764 = vmatpush.bf16.msra.mxu0 0
    %765 = vmatpush.bf16.msra.mxu0 0
    %766 = vmatpush.bf16.msra.mxu0 0
    %767 = vmatpush.bf16.msra.mxu0 0
    %768 = vmatpush.bf16.msra.mxu0 %v759
    %769 = vmatmul.bf16.gmra.mxu0 %v756
    %v770 = vpop.f32.mrf.mxu0
    %v771 = vadd.f32 0.0, %v770
    %v772 = vpop.f32.mrf.mxu0
    %v773 = vadd.f32 0.0, %v772
    %774 = vdwg.mxu0
    %v777 = vunpack.c.l.b16 %v128
    %v778 = vunpack.c.l.b16 %v129
    %v779 = vpack.c.b16 %v778, %v777
    %v781 = vsel %vm155, %v779, 0
    %v784 = vsel %vm159, %v90, 0
    %786 = vmatpush.bf16.msra.mxu0 0
    %787 = vmatpush.bf16.msra.mxu0 0
    %788 = vmatpush.bf16.msra.mxu0 0
    %789 = vmatpush.bf16.msra.mxu0 0
    %790 = vmatpush.bf16.msra.mxu0 0
    %791 = vmatpush.bf16.msra.mxu0 0
    %792 = vmatpush.bf16.msra.mxu0 0
    %793 = vmatpush.bf16.msra.mxu0 %v784
    %794 = vmatmul.bf16.gmra.mxu0 %v781
    %v795 = vpop.f32.mrf.mxu0
    %v796 = vadd.f32 0.0, %v795
    %v797 = vpop.f32.mrf.mxu0
    %v798 = vadd.f32 0.0, %v797
    %799 = vdwg.mxu0
    %v801 = vsel %vm159, %v89, 0
    %803 = vmatpush.bf16.msra.mxu0 0
    %804 = vmatpush.bf16.msra.mxu0 0
    %805 = vmatpush.bf16.msra.mxu0 0
    %806 = vmatpush.bf16.msra.mxu0 0
    %807 = vmatpush.bf16.msra.mxu0 0
    %808 = vmatpush.bf16.msra.mxu0 0
    %809 = vmatpush.bf16.msra.mxu0 0
    %810 = vmatpush.bf16.msra.mxu0 %v801
    %811 = vmatmul.bf16.gmra.mxu0 %v781
    %v812 = vpop.f32.mrf.mxu0
    %v813 = vadd.f32 %v771, %v812
    %v814 = vpop.f32.mrf.mxu0
    %v815 = vadd.f32 %v773, %v814
    %816 = vdwg.mxu0
    %v817 = vpack.c.bf16 %v815, %v813
    %v818 = vpack.c.bf16 %v798, %v796
    %v823 = vunpack.c.l.b16 %v149
    %v824 = vunpack.c.l.b16 %v150
    %v825 = vunpack.c.l.b16 %v151
    %v826 = vunpack.c.l.b16 %v152
    %v827 = vpack.c.b16 %v824, %v823
    %v828 = vpack.c.b16 %v826, %v825
    %v830 = vsel %vm277, %v827, 0
    %v833 = vsel %vm277, %v828, 0
    %835 = vmatpush.bf16.msra.mxu0 0
    %836 = vmatpush.bf16.msra.mxu0 0
    %837 = vmatpush.bf16.msra.mxu0 0
    %838 = vmatpush.bf16.msra.mxu0 0
    %839 = vmatpush.bf16.msra.mxu0 0
    %840 = vmatpush.bf16.msra.mxu0 0
    %841 = vmatpush.bf16.msra.mxu0 0
    %842 = vmatpush.bf16.msra.mxu0 %v818
    %843 = vmatmul.bf16.gmra.mxu0 %v830
    %v844 = vpop.f32.mrf.mxu0
    %v845 = vadd.f32 0.0, %v844
    %v846 = vpop.f32.mrf.mxu0
    %v847 = vadd.f32 0.0, %v846
    %848 = vmatmul.bf16.gmra.mxu0 %v833
    %v849 = vpop.f32.mrf.mxu0
    %v850 = vadd.f32 0.0, %v849
    %v851 = vpop.f32.mrf.mxu0
    %v852 = vadd.f32 0.0, %v851
    %853 = vdwg.mxu0
    %v858 = vunpack.c.l.b16 %v145
    %v859 = vunpack.c.l.b16 %v146
    %v860 = vunpack.c.l.b16 %v147
    %v861 = vunpack.c.l.b16 %v148
    %v862 = vpack.c.b16 %v859, %v858
    %v863 = vpack.c.b16 %v861, %v860
    %v865 = vsel %vm277, %v862, 0
    %v868 = vsel %vm277, %v863, 0
    %870 = vmatpush.bf16.msra.mxu0 0
    %871 = vmatpush.bf16.msra.mxu0 0
    %872 = vmatpush.bf16.msra.mxu0 0
    %873 = vmatpush.bf16.msra.mxu0 0
    %874 = vmatpush.bf16.msra.mxu0 0
    %875 = vmatpush.bf16.msra.mxu0 0
    %876 = vmatpush.bf16.msra.mxu0 0
    %877 = vmatpush.bf16.msra.mxu0 %v817
    %878 = vmatmul.bf16.gmra.mxu0 %v865
    %v879 = vpop.f32.mrf.mxu0
    %v880 = vadd.f32 %v845, %v879
    %v881 = vpop.f32.mrf.mxu0
    %v882 = vadd.f32 %v847, %v881
    %883 = vmatmul.bf16.gmra.mxu0 %v868
    %v884 = vpop.f32.mrf.mxu0
    %v885 = vadd.f32 %v850, %v884
    %v886 = vpop.f32.mrf.mxu0
    %v887 = vadd.f32 %v852, %v886
    %888 = vdwg.mxu0
    %v893 = vunpack.c.l.b16 %v130
    %v894 = vunpack.c.l.b16 %v131
    %v895 = vunpack.c.l.b16 %v132
    %v896 = vunpack.c.l.b16 %v133
    %v897 = vpack.c.b16 %v894, %v893
    %v898 = vpack.c.b16 %v896, %v895
    %v900 = vsel %vm155, %v897, 0
    %v903 = vsel %vm155, %v898, 0
    %v906 = vsel %vm159, %v91, 0
    %908 = vmatpush.bf16.msra.mxu0 0
    %909 = vmatpush.bf16.msra.mxu0 0
    %910 = vmatpush.bf16.msra.mxu0 0
    %911 = vmatpush.bf16.msra.mxu0 0
    %912 = vmatpush.bf16.msra.mxu0 0
    %913 = vmatpush.bf16.msra.mxu0 0
    %914 = vmatpush.bf16.msra.mxu0 0
    %915 = vmatpush.bf16.msra.mxu0 %v906
    %916 = vmatmul.bf16.gmra.mxu0 %v900
    %v917 = vpop.f32.mrf.mxu0
    %v918 = vadd.f32 0.0, %v917
    %v919 = vpop.f32.mrf.mxu0
    %v920 = vadd.f32 0.0, %v919
    %921 = vmatmul.bf16.gmra.mxu0 %v903
    %v922 = vpop.f32.mrf.mxu0
    %v923 = vadd.f32 0.0, %v922
    %v924 = vpop.f32.mrf.mxu0
    %v925 = vadd.f32 0.0, %v924
    %926 = vdwg.mxu0
    %v927 = vadd.f32 %v880, %v918
    %v928 = vadd.f32 %v882, %v920
    %v929 = vadd.f32 %v885, %v923
    %v930 = vadd.f32 %v887, %v925
    %v931 = vperm.slane %v119, 6
    %v932 = vadd.f32 %v927, %v931
    %v933 = vadd.f32 %v928, %v931
    %v934 = vadd.f32 %v929, %v931
    %v935 = vadd.f32 %v930, %v931
    %v936 = vmax.f32 %v932, 0.0
    %v937 = vmax.f32 %v933, 0.0
    %v938 = vmax.f32 %v934, 0.0
    %v939 = vmax.f32 %v935, 0.0
    %v940 = vpack.c.bf16 %v937, %v936
    %v941 = vpack.c.bf16 %v939, %v938
    %v942 = vperm.slane %v119, 7
    %v947 = vunpack.c.l.b16 %v94
    %v948 = vunpack.c.l.b16 %v95
    %v949 = vunpack.c.l.b16 %v96
    %v950 = vunpack.c.l.b16 %v97
    %v951 = vpack.c.b16 %v948, %v947
    %v952 = vpack.c.b16 %v950, %v949
    %v956 = vsel %vm404, %v940, 0
    %v959 = vsel %vm404, %v941, 0
    %961 = vmatpush.bf16.msra.mxu0 0
    %962 = vmatpush.bf16.msra.mxu0 0
    %963 = vmatpush.bf16.msra.mxu0 0
    %964 = vmatpush.bf16.msra.mxu0 0
    %965 = vmatpush.bf16.msra.mxu0 0
    %966 = vmatpush.bf16.msra.mxu0 0
    %967 = vmatpush.bf16.msra.mxu0 %v952
    %968 = vmatpush.bf16.msra.mxu0 %v951
    %969 = vmatmul.bf16.gmra.mxu0 %v956
    %v970 = vpop.f32.mrf.mxu0
    %v971 = vadd.f32 %v942, %v970
    %v972 = vpop.f32.mrf.mxu0
    %v973 = vadd.f32 %v942, %v972
    %974 = vmatmul.bf16.gmra.mxu0 %v959
    %v975 = vpop.f32.mrf.mxu0
    %v976 = vadd.f32 %v942, %v975
    %v977 = vpop.f32.mrf.mxu0
    %v978 = vadd.f32 %v942, %v977
    %979 = vdwg.mxu0
    %v980 = vpack.c.bf16 %v973, %v971
    %v981 = vpack.c.bf16 %v978, %v976
    %984 = vxpose.xlu0.c.b16.start [1/8] %v827, 128
    %985 = vxpose.xlu0.c.b16.cont [2/8] %v828, 128
    %986 = vxpose.xlu0.c.b16.cont [3/8] 0, 128
    %987 = vxpose.xlu0.c.b16.cont [4/8] 0, 128
    %988 = vxpose.xlu0.c.b16.cont [5/8] 0, 128
    %989 = vxpose.xlu0.c.b16.cont [6/8] 0, 128
    %990 = vxpose.xlu0.c.b16.cont [7/8] 0, 128
    %991 = vxpose.xlu0.c.b16.end [8/8] 0, 128
    %v992 = vpop.trf.xlu0
    %v993 = vpop.trf.xlu0
    %v994 = vpop.trf.xlu0
    %v995 = vpop.trf.xlu0
    %v996 = vpop.trf.xlu0
    %v997 = vpop.trf.xlu0
    %v998 = vpop.trf.xlu0
    %v999 = vpop.trf.xlu0
    %v1001 = vsel %vm404, %v992, 0
    %1003 = vmatpush.bf16.msra.mxu0 0
    %1004 = vmatpush.bf16.msra.mxu0 0
    %1005 = vmatpush.bf16.msra.mxu0 0
    %1006 = vmatpush.bf16.msra.mxu0 0
    %1007 = vmatpush.bf16.msra.mxu0 0
    %1008 = vmatpush.bf16.msra.mxu0 0
    %1009 = vmatpush.bf16.msra.mxu0 %v981
    %1010 = vmatpush.bf16.msra.mxu0 %v980
    %1011 = vmatmul.bf16.gmra.mxu0 %v1001
    %v1012 = vpop.f32.mrf.mxu0
    %v1013 = vadd.f32 0.0, %v1012
    %v1014 = vpop.f32.mrf.mxu0
    %v1015 = vadd.f32 0.0, %v1014
    %1016 = vdwg.mxu0
    %v1017 = vpack.c.bf16 %v1015, %v1013
    %v1019 = vsel %vm159, %v101, 0
    %1021 = vmatpush.bf16.msra.mxu0 0
    %1022 = vmatpush.bf16.msra.mxu0 0
    %1023 = vmatpush.bf16.msra.mxu0 0
    %1024 = vmatpush.bf16.msra.mxu0 0
    %1025 = vmatpush.bf16.msra.mxu0 0
    %1026 = vmatpush.bf16.msra.mxu0 0
    %1027 = vmatpush.bf16.msra.mxu0 0
    %1028 = vmatpush.bf16.msra.mxu0 %v1019
    %1029 = vmatmul.bf16.gmra.mxu0 %v715
    %v1030 = vpop.f32.mrf.mxu0
    %v1031 = vadd.f32 0.0, %v1030
    %v1032 = vpop.f32.mrf.mxu0
    %1033 = vdwg.mxu0
    %v1035 = vsel %vm159, %v100, 0
    %1037 = vmatpush.bf16.msra.mxu0 0
    %1038 = vmatpush.bf16.msra.mxu0 0
    %1039 = vmatpush.bf16.msra.mxu0 0
    %1040 = vmatpush.bf16.msra.mxu0 0
    %1041 = vmatpush.bf16.msra.mxu0 0
    %1042 = vmatpush.bf16.msra.mxu0 0
    %1043 = vmatpush.bf16.msra.mxu0 0
    %1044 = vmatpush.bf16.msra.mxu0 %v1035
    %1045 = vmatmul.bf16.gmra.mxu0 %v157
    %v1046 = vpop.f32.mrf.mxu0
    %v1047 = vadd.f32 %v1031, %v1046
    %v1048 = vpop.f32.mrf.mxu0
    %1049 = vdwg.mxu0
    %v1051 = vsel %vm155, %v1017, 0
    %v1054 = vsel %vm159, %v99, 0
    %1056 = vmatpush.bf16.msra.mxu0 0
    %1057 = vmatpush.bf16.msra.mxu0 0
    %1058 = vmatpush.bf16.msra.mxu0 0
    %1059 = vmatpush.bf16.msra.mxu0 0
    %1060 = vmatpush.bf16.msra.mxu0 0
    %1061 = vmatpush.bf16.msra.mxu0 0
    %1062 = vmatpush.bf16.msra.mxu0 0
    %1063 = vmatpush.bf16.msra.mxu0 %v1054
    %1064 = vmatmul.bf16.gmra.mxu0 %v1051
    %v1065 = vpop.f32.mrf.mxu0
    %v1066 = vadd.f32 0.0, %v1065
    %v1067 = vpop.f32.mrf.mxu0
    %v1068 = vadd.f32 0.0, %v1067
    %1069 = vdwg.mxu0
    %v1071 = vsel %vm159, %v98, 0
    %1073 = vmatpush.bf16.msra.mxu0 0
    %1074 = vmatpush.bf16.msra.mxu0 0
    %1075 = vmatpush.bf16.msra.mxu0 0
    %1076 = vmatpush.bf16.msra.mxu0 0
    %1077 = vmatpush.bf16.msra.mxu0 0
    %1078 = vmatpush.bf16.msra.mxu0 0
    %1079 = vmatpush.bf16.msra.mxu0 0
    %1080 = vmatpush.bf16.msra.mxu0 %v1071
    %1081 = vmatmul.bf16.gmra.mxu0 %v781
    %v1082 = vpop.f32.mrf.mxu0
    %v1083 = vadd.f32 %v1066, %v1082
    %v1084 = vpop.f32.mrf.mxu0
    %v1085 = vadd.f32 %v1068, %v1084
    %1086 = vdwg.mxu0
    %v1087 = vpack.c.bf16 %v1047, %v1047
    %v1089 = vsel %vm205, %v1087, 0
    %1091 = vmatpush.bf16.msra.mxu0 0
    %1092 = vmatpush.bf16.msra.mxu0 0
    %1093 = vmatpush.bf16.msra.mxu0 0
    %1094 = vmatpush.bf16.msra.mxu0 0
    %1095 = vmatpush.bf16.msra.mxu0 0
    %1096 = vmatpush.bf16.msra.mxu0 0
    %1097 = vmatpush.bf16.msra.mxu0 0
    %1098 = vmatpush.bf16.msra.mxu0 %v1089
    %1099 = vmatmul.bf16.gmra.mxu0 %v756
    %v1100 = vpop.f32.mrf.mxu0
    %v1101 = vadd.f32 0.0, %v1100
    %v1102 = vpop.f32.mrf.mxu0
    %v1103 = vadd.f32 0.0, %v1102
    %1104 = vdwg.mxu0
    %v1105 = vadd.f32 %v1083, %v1101
    %v1106 = vadd.f32 %v1085, %v1103
    %v1107 = vperm.slane %v120, 0
    %v1108 = vadd.f32 %v1105, %v1107
    %v1109 = vadd.f32 %v1106, %v1107
    %v1110 = vmax.f32 %v1108, 0.0
    %v1111 = vmax.f32 %v1109, 0.0
    %v1112 = vpack.c.bf16 %v1111, %v1110
    %v1113 = vperm.slane %v120, 1
    %v1118 = vunpack.c.l.b16 %v102
    %v1119 = vunpack.c.l.b16 %v103
    %v1120 = vunpack.c.l.b16 %v104
    %v1121 = vunpack.c.l.b16 %v105
    %v1122 = vpack.c.b16 %v1119, %v1118
    %v1123 = vpack.c.b16 %v1121, %v1120
    %v1127 = vsel %vm404, %v1112, 0
    %1129 = vmatpush.bf16.msra.mxu0 0
    %1130 = vmatpush.bf16.msra.mxu0 0
    %1131 = vmatpush.bf16.msra.mxu0 0
    %1132 = vmatpush.bf16.msra.mxu0 0
    %1133 = vmatpush.bf16.msra.mxu0 0
    %1134 = vmatpush.bf16.msra.mxu0 0
    %1135 = vmatpush.bf16.msra.mxu0 %v1123
    %1136 = vmatpush.bf16.msra.mxu0 %v1122
    %1137 = vmatmul.bf16.gmra.mxu0 %v1127
    %v1138 = vpop.f32.mrf.mxu0
    %v1139 = vadd.f32 %v1113, %v1138
    %v1140 = vpop.f32.mrf.mxu0
    %v1141 = vadd.f32 %v1113, %v1140
    %1142 = vdwg.mxu0
    %v1143 = vpack.c.bf16 %v1141, %v1139
    %1145 = vxpose.xlu0.c.b16.start [1/8] %v754, 128
    %1146 = vxpose.xlu0.c.b16.cont [2/8] 0, 128
    %1147 = vxpose.xlu0.c.b16.cont [3/8] 0, 128
    %1148 = vxpose.xlu0.c.b16.cont [4/8] 0, 128
    %1149 = vxpose.xlu0.c.b16.cont [5/8] 0, 128
    %1150 = vxpose.xlu0.c.b16.cont [6/8] 0, 128
    %1151 = vxpose.xlu0.c.b16.cont [7/8] 0, 128
    %1152 = vxpose.xlu0.c.b16.end [8/8] 0, 128
    %v1153 = vpop.trf.xlu0
    %v1154 = vpop.trf.xlu0
    %v1155 = vpop.trf.xlu0
    %v1156 = vpop.trf.xlu0
    %v1157 = vpop.trf.xlu0
    %v1158 = vpop.trf.xlu0
    %v1159 = vpop.trf.xlu0
    %v1160 = vpop.trf.xlu0
    %v1162 = vsel %vm277, %v1153, 0
    %1164 = vmatpush.bf16.msra.mxu0 0
    %1165 = vmatpush.bf16.msra.mxu0 0
    %1166 = vmatpush.bf16.msra.mxu0 0
    %1167 = vmatpush.bf16.msra.mxu0 0
    %1168 = vmatpush.bf16.msra.mxu0 0
    %1169 = vmatpush.bf16.msra.mxu0 0
    %1170 = vmatpush.bf16.msra.mxu0 0
    %1171 = vmatpush.bf16.msra.mxu0 %v1143
    %1172 = vmatmul.bf16.gmra.mxu0 %v1162
    %v1173 = vpop.f32.mrf.mxu0
    %v1174 = vadd.f32 0.0, %v1173
    %v1175 = vpop.f32.mrf.mxu0
    %1176 = vdwg.mxu0
    %v1177 = vpack.c.bf16 %v1174, %v1174
    %v1179 = vsel %vm159, %v107, 0
    %1181 = vmatpush.bf16.msra.mxu0 0
    %1182 = vmatpush.bf16.msra.mxu0 0
    %1183 = vmatpush.bf16.msra.mxu0 0
    %1184 = vmatpush.bf16.msra.mxu0 0
    %1185 = vmatpush.bf16.msra.mxu0 0
    %1186 = vmatpush.bf16.msra.mxu0 0
    %1187 = vmatpush.bf16.msra.mxu0 0
    %1188 = vmatpush.bf16.msra.mxu0 %v1179
    %1189 = vmatmul.bf16.gmra.mxu0 %v157
    %v1190 = vpop.f32.mrf.mxu0
    %v1191 = vadd.f32 0.0, %v1190
    %v1192 = vpop.f32.mrf.mxu0
    %1193 = vdwg.mxu0
    %v1195 = vsel %vm155, %v1177, 0
    %v1198 = vsel %vm159, %v106, 0
    %1200 = vmatpush.bf16.msra.mxu0 0
    %1201 = vmatpush.bf16.msra.mxu0 0
    %1202 = vmatpush.bf16.msra.mxu0 0
    %1203 = vmatpush.bf16.msra.mxu0 0
    %1204 = vmatpush.bf16.msra.mxu0 0
    %1205 = vmatpush.bf16.msra.mxu0 0
    %1206 = vmatpush.bf16.msra.mxu0 0
    %1207 = vmatpush.bf16.msra.mxu0 %v1198
    %1208 = vmatmul.bf16.gmra.mxu0 %v1195
    %v1209 = vpop.f32.mrf.mxu0
    %v1210 = vadd.f32 %v1191, %v1209
    %v1211 = vpop.f32.mrf.mxu0
    %1212 = vdwg.mxu0
    %v1214 = vsel %vm159, %v108, 0
    %1216 = vmatpush.bf16.msra.mxu0 0
    %1217 = vmatpush.bf16.msra.mxu0 0
    %1218 = vmatpush.bf16.msra.mxu0 0
    %1219 = vmatpush.bf16.msra.mxu0 0
    %1220 = vmatpush.bf16.msra.mxu0 0
    %1221 = vmatpush.bf16.msra.mxu0 0
    %1222 = vmatpush.bf16.msra.mxu0 0
    %1223 = vmatpush.bf16.msra.mxu0 %v1214
    %1224 = vmatmul.bf16.gmra.mxu0 %v715
    %v1225 = vpop.f32.mrf.mxu0
    %v1226 = vadd.f32 0.0, %v1225
    %v1227 = vpop.f32.mrf.mxu0
    %1228 = vdwg.mxu0
    %v1229 = vadd.f32 %v1210, %v1226
    %v1230 = vperm.slane %v120, 2
    %v1231 = vadd.f32 %v1229, %v1230
    %v1232 = vmax.f32 %v1231, 0.0
    %v1233 = vpack.c.bf16 %v1232, %v1232
    %v1234 = vperm.slane %v120, 3
    %v1239 = vunpack.c.l.b16 %v109
    %v1240 = vunpack.c.l.b16 %v110
    %v1241 = vunpack.c.l.b16 %v111
    %v1242 = vunpack.c.l.b16 %v112
    %v1243 = vpack.c.b16 %v1240, %v1239
    %v1244 = vpack.c.b16 %v1242, %v1241
    %v1248 = vsel %vm404, %v1233, 0
    %1250 = vmatpush.bf16.msra.mxu0 0
    %1251 = vmatpush.bf16.msra.mxu0 0
    %1252 = vmatpush.bf16.msra.mxu0 0
    %1253 = vmatpush.bf16.msra.mxu0 0
    %1254 = vmatpush.bf16.msra.mxu0 0
    %1255 = vmatpush.bf16.msra.mxu0 0
    %1256 = vmatpush.bf16.msra.mxu0 %v1244
    %1257 = vmatpush.bf16.msra.mxu0 %v1243
    %1258 = vmatmul.bf16.gmra.mxu0 %v1248
    %v1259 = vpop.f32.mrf.mxu0
    %v1260 = vadd.f32 %v1234, %v1259
    %v1261 = vpop.f32.mrf.mxu0
    %1262 = vdwg.mxu0
    %v1263 = vpack.c.bf16 %v1260, %v1260
    %v1265 = vsel %vm155, %v1263, 0
    %v1268 = vsel %vm159, %v114, 0
    %1270 = vmatpush.bf16.msra.mxu0 0
    %1271 = vmatpush.bf16.msra.mxu0 0
    %1272 = vmatpush.bf16.msra.mxu0 0
    %1273 = vmatpush.bf16.msra.mxu0 0
    %1274 = vmatpush.bf16.msra.mxu0 0
    %1275 = vmatpush.bf16.msra.mxu0 0
    %1276 = vmatpush.bf16.msra.mxu0 0
    %1277 = vmatpush.bf16.msra.mxu0 %v1268
    %1278 = vmatmul.bf16.gmra.mxu0 %v1265
    %v1279 = vpop.f32.mrf.mxu0
    %v1280 = vadd.f32 0.0, %v1279
    %v1281 = vpop.f32.mrf.mxu0
    %1282 = vdwg.mxu0
    %v1284 = vsel %vm159, %v113, 0
    %1286 = vmatpush.bf16.msra.mxu0 0
    %1287 = vmatpush.bf16.msra.mxu0 0
    %1288 = vmatpush.bf16.msra.mxu0 0
    %1289 = vmatpush.bf16.msra.mxu0 0
    %1290 = vmatpush.bf16.msra.mxu0 0
    %1291 = vmatpush.bf16.msra.mxu0 0
    %1292 = vmatpush.bf16.msra.mxu0 0
    %1293 = vmatpush.bf16.msra.mxu0 %v1284
    %1294 = vmatmul.bf16.gmra.mxu0 %v715
    %v1295 = vpop.f32.mrf.mxu0
    %v1296 = vadd.f32 %v1280, %v1295
    %v1297 = vpop.f32.mrf.mxu0
    %1298 = vdwg.mxu0
    %v1299 = vperm.slane %v120, 4
    %v1300 = vadd.f32 %v1296, %v1299
    %v1301 = vmax.f32 %v1300, 0.0
    %v1302 = vpack.c.bf16 %v1301, %v1301
    %v1303 = vperm.slane %v120, 5
    %v1308 = vunpack.c.l.b16 %v115
    %v1309 = vunpack.c.l.b16 %v116
    %v1310 = vunpack.c.l.b16 %v117
    %v1311 = vunpack.c.l.b16 %v118
    %v1312 = vpack.c.b16 %v1309, %v1308
    %v1313 = vpack.c.b16 %v1311, %v1310
    %v1317 = vsel %vm404, %v1302, 0
    %1319 = vmatpush.bf16.msra.mxu0 0
    %1320 = vmatpush.bf16.msra.mxu0 0
    %1321 = vmatpush.bf16.msra.mxu0 0
    %1322 = vmatpush.bf16.msra.mxu0 0
    %1323 = vmatpush.bf16.msra.mxu0 0
    %1324 = vmatpush.bf16.msra.mxu0 0
    %1325 = vmatpush.bf16.msra.mxu0 %v1313
    %1326 = vmatpush.bf16.msra.mxu0 %v1312
    %1327 = vmatmul.bf16.gmra.mxu0 %v1317
    %v1328 = vpop.f32.mrf.mxu0
    %v1329 = vadd.f32 %v1303, %v1328
    %v1330 = vpop.f32.mrf.mxu0
    %1331 = vdwg.mxu0
    %1332 = vst [vmem:[#allocation5] sm:$0x3] %v1329
    %1333 = vmatpush.bf16.msra.mxu0 0
    %1334 = vmatpush.bf16.msra.mxu0 0
    %1335 = vmatpush.bf16.msra.mxu0 0
    %1336 = vmatpush.bf16.msra.mxu0 0
    %1337 = vmatpush.bf16.msra.mxu0 0
    %1338 = vmatpush.bf16.msra.mxu0 0
    %1339 = vmatpush.bf16.msra.mxu0 0
    %1340 = vmatpush.bf16.msra.mxu0 %v161
    %1341 = vmatmul.bf16.gmra.mxu0 %v1265
    %v1342 = vpop.f32.mrf.mxu0
    %v1343 = vadd.f32 0.0, %v1342
    %v1344 = vpop.f32.mrf.mxu0
    %1345 = vdwg.mxu0
    %1346 = vmatpush.bf16.msra.mxu0 0
    %1347 = vmatpush.bf16.msra.mxu0 0
    %1348 = vmatpush.bf16.msra.mxu0 0
    %1349 = vmatpush.bf16.msra.mxu0 0
    %1350 = vmatpush.bf16.msra.mxu0 0
    %1351 = vmatpush.bf16.msra.mxu0 0
    %1352 = vmatpush.bf16.msra.mxu0 0
    %1353 = vmatpush.bf16.msra.mxu0 %v180
    %1354 = vmatmul.bf16.gmra.mxu0 %v715
    %v1355 = vpop.f32.mrf.mxu0
    %v1356 = vadd.f32 %v1343, %v1355
    %v1357 = vpop.f32.mrf.mxu0
    %1358 = vdwg.mxu0
    %v1359 = vpack.c.bf16 %v1356, %v1356
    %v1361 = vsel %vm205, %v1359, 0
    %1363 = vmatpush.bf16.msra.mxu0 0
    %1364 = vmatpush.bf16.msra.mxu0 0
    %1365 = vmatpush.bf16.msra.mxu0 0
    %1366 = vmatpush.bf16.msra.mxu0 0
    %1367 = vmatpush.bf16.msra.mxu0 0
    %1368 = vmatpush.bf16.msra.mxu0 0
    %1369 = vmatpush.bf16.msra.mxu0 0
    %1370 = vmatpush.bf16.msra.mxu0 %v1361
    %1371 = vmatmul.bf16.gmra.mxu0 %v203
    %v1372 = vpop.f32.mrf.mxu0
    %v1373 = vadd.f32 0.0, %v1372
    %v1374 = vpop.f32.mrf.mxu0
    %v1375 = vadd.f32 0.0, %v1374
    %1376 = vdwg.mxu0
    %v1378 = vsel %vm155, %v593, 0
    %1380 = vmatpush.bf16.msra.mxu0 0
    %1381 = vmatpush.bf16.msra.mxu0 0
    %1382 = vmatpush.bf16.msra.mxu0 0
    %1383 = vmatpush.bf16.msra.mxu0 0
    %1384 = vmatpush.bf16.msra.mxu0 0
    %1385 = vmatpush.bf16.msra.mxu0 0
    %1386 = vmatpush.bf16.msra.mxu0 0
    %1387 = vmatpush.bf16.msra.mxu0 %v232
    %1388 = vmatmul.bf16.gmra.mxu0 %v1378
    %v1389 = vpop.f32.mrf.mxu0
    %v1390 = vadd.f32 0.0, %v1389
    %v1391 = vpop.f32.mrf.mxu0
    %v1392 = vadd.f32 0.0, %v1391
    %1393 = vdwg.mxu0
    %1394 = vmatpush.bf16.msra.mxu0 0
    %1395 = vmatpush.bf16.msra.mxu0 0
    %1396 = vmatpush.bf16.msra.mxu0 0
    %1397 = vmatpush.bf16.msra.mxu0 0
    %1398 = vmatpush.bf16.msra.mxu0 0
    %1399 = vmatpush.bf16.msra.mxu0 0
    %1400 = vmatpush.bf16.msra.mxu0 0
    %1401 = vmatpush.bf16.msra.mxu0 %v249
    %1402 = vmatmul.bf16.gmra.mxu0 %v1378
    %v1403 = vpop.f32.mrf.mxu0
    %v1404 = vadd.f32 %v1373, %v1403
    %v1405 = vpop.f32.mrf.mxu0
    %v1406 = vadd.f32 %v1375, %v1405
    %1407 = vdwg.mxu0
    %v1408 = vpack.c.bf16 %v1406, %v1404
    %v1409 = vpack.c.bf16 %v1392, %v1390
    %1410 = vmatpush.bf16.msra.mxu0 0
    %1411 = vmatpush.bf16.msra.mxu0 0
    %1412 = vmatpush.bf16.msra.mxu0 0
    %1413 = vmatpush.bf16.msra.mxu0 0
    %1414 = vmatpush.bf16.msra.mxu0 0
    %1415 = vmatpush.bf16.msra.mxu0 0
    %1416 = vmatpush.bf16.msra.mxu0 0
    %1417 = vmatpush.bf16.msra.mxu0 %v1409
    %1418 = vmatmul.bf16.gmra.mxu0 %v279
    %v1419 = vpop.f32.mrf.mxu0
    %v1420 = vadd.f32 0.0, %v1419
    %v1421 = vpop.f32.mrf.mxu0
    %v1422 = vadd.f32 0.0, %v1421
    %1423 = vmatmul.bf16.gmra.mxu0 %v282
    %v1424 = vpop.f32.mrf.mxu0
    %v1425 = vadd.f32 0.0, %v1424
    %v1426 = vpop.f32.mrf.mxu0
    %v1427 = vadd.f32 0.0, %v1426
    %1428 = vdwg.mxu0
    %1429 = vmatpush.bf16.msra.mxu0 0
    %1430 = vmatpush.bf16.msra.mxu0 0
    %1431 = vmatpush.bf16.msra.mxu0 0
    %1432 = vmatpush.bf16.msra.mxu0 0
    %1433 = vmatpush.bf16.msra.mxu0 0
    %1434 = vmatpush.bf16.msra.mxu0 0
    %1435 = vmatpush.bf16.msra.mxu0 0
    %1436 = vmatpush.bf16.msra.mxu0 %v1408
    %1437 = vmatmul.bf16.gmra.mxu0 %v314
    %v1438 = vpop.f32.mrf.mxu0
    %v1439 = vadd.f32 %v1420, %v1438
    %v1440 = vpop.f32.mrf.mxu0
    %v1441 = vadd.f32 %v1422, %v1440
    %1442 = vmatmul.bf16.gmra.mxu0 %v317
    %v1443 = vpop.f32.mrf.mxu0
    %v1444 = vadd.f32 %v1425, %v1443
    %v1445 = vpop.f32.mrf.mxu0
    %v1446 = vadd.f32 %v1427, %v1445
    %1447 = vdwg.mxu0
    %v1449 = vsel %vm155, %v430, 0
    %v1452 = vsel %vm155, %v431, 0
    %1454 = vmatpush.bf16.msra.mxu0 0
    %1455 = vmatpush.bf16.msra.mxu0 0
    %1456 = vmatpush.bf16.msra.mxu0 0
    %1457 = vmatpush.bf16.msra.mxu0 0
    %1458 = vmatpush.bf16.msra.mxu0 0
    %1459 = vmatpush.bf16.msra.mxu0 0
    %1460 = vmatpush.bf16.msra.mxu0 0
    %1461 = vmatpush.bf16.msra.mxu0 %v355
    %1462 = vmatmul.bf16.gmra.mxu0 %v1449
    %v1463 = vpop.f32.mrf.mxu0
    %v1464 = vadd.f32 0.0, %v1463
    %v1465 = vpop.f32.mrf.mxu0
    %v1466 = vadd.f32 0.0, %v1465
    %1467 = vmatmul.bf16.gmra.mxu0 %v1452
    %v1468 = vpop.f32.mrf.mxu0
    %v1469 = vadd.f32 0.0, %v1468
    %v1470 = vpop.f32.mrf.mxu0
    %v1471 = vadd.f32 0.0, %v1470
    %1472 = vdwg.mxu0
    %v1473 = vadd.f32 %v1439, %v1464
    %v1474 = vadd.f32 %v1441, %v1466
    %v1475 = vadd.f32 %v1444, %v1469
    %v1476 = vadd.f32 %v1446, %v1471
    %v1477 = vadd.f32 %v1473, %v380
    %v1478 = vadd.f32 %v1474, %v380
    %v1479 = vadd.f32 %v1475, %v380
    %v1480 = vadd.f32 %v1476, %v380
    %v1481 = vmax.f32 %v1477, 0.0
    %v1482 = vmax.f32 %v1478, 0.0
    %v1483 = vmax.f32 %v1479, 0.0
    %v1484 = vmax.f32 %v1480, 0.0
    %v1485 = vpack.c.bf16 %v1482, %v1481
    %v1486 = vpack.c.bf16 %v1484, %v1483
    %v1488 = vsel %vm404, %v1485, 0
    %v1491 = vsel %vm404, %v1486, 0
    %1493 = vmatpush.bf16.msra.mxu0 0
    %1494 = vmatpush.bf16.msra.mxu0 0
    %1495 = vmatpush.bf16.msra.mxu0 0
    %1496 = vmatpush.bf16.msra.mxu0 0
    %1497 = vmatpush.bf16.msra.mxu0 0
    %1498 = vmatpush.bf16.msra.mxu0 0
    %1499 = vmatpush.bf16.msra.mxu0 %v401
    %1500 = vmatpush.bf16.msra.mxu0 %v400
    %1501 = vmatmul.bf16.gmra.mxu0 %v1488
    %v1502 = vpop.f32.mrf.mxu0
    %v1503 = vadd.f32 %v391, %v1502
    %v1504 = vpop.f32.mrf.mxu0
    %v1505 = vadd.f32 %v391, %v1504
    %1506 = vmatmul.bf16.gmra.mxu0 %v1491
    %v1507 = vpop.f32.mrf.mxu0
    %v1508 = vadd.f32 %v391, %v1507
    %v1509 = vpop.f32.mrf.mxu0
    %v1510 = vadd.f32 %v391, %v1509
    %1511 = vdwg.mxu0
    %v1512 = vpack.c.bf16 %v1505, %v1503
    %v1513 = vpack.c.bf16 %v1510, %v1508
    %1514 = vmatpush.bf16.msra.mxu0 0
    %1515 = vmatpush.bf16.msra.mxu0 0
    %1516 = vmatpush.bf16.msra.mxu0 0
    %1517 = vmatpush.bf16.msra.mxu0 0
    %1518 = vmatpush.bf16.msra.mxu0 0
    %1519 = vmatpush.bf16.msra.mxu0 0
    %1520 = vmatpush.bf16.msra.mxu0 %v1513
    %1521 = vmatpush.bf16.msra.mxu0 %v1512
    %1522 = vmatmul.bf16.gmra.mxu0 %v451
    %v1523 = vpop.f32.mrf.mxu0
    %v1524 = vadd.f32 0.0, %v1523
    %v1525 = vpop.f32.mrf.mxu0
    %v1526 = vadd.f32 0.0, %v1525
    %1527 = vdwg.mxu0
    %v1528 = vpack.c.bf16 %v1526, %v1524
    %1529 = vmatpush.bf16.msra.mxu0 0
    %1530 = vmatpush.bf16.msra.mxu0 0
    %1531 = vmatpush.bf16.msra.mxu0 0
    %1532 = vmatpush.bf16.msra.mxu0 0
    %1533 = vmatpush.bf16.msra.mxu0 0
    %1534 = vmatpush.bf16.msra.mxu0 0
    %1535 = vmatpush.bf16.msra.mxu0 0
    %1536 = vmatpush.bf16.msra.mxu0 %v469
    %1537 = vmatmul.bf16.gmra.mxu0 %v1265
    %v1538 = vpop.f32.mrf.mxu0
    %v1539 = vadd.f32 0.0, %v1538
    %v1540 = vpop.f32.mrf.mxu0
    %1541 = vdwg.mxu0
    %1542 = vmatpush.bf16.msra.mxu0 0
    %1543 = vmatpush.bf16.msra.mxu0 0
    %1544 = vmatpush.bf16.msra.mxu0 0
    %1545 = vmatpush.bf16.msra.mxu0 0
    %1546 = vmatpush.bf16.msra.mxu0 0
    %1547 = vmatpush.bf16.msra.mxu0 0
    %1548 = vmatpush.bf16.msra.mxu0 0
    %1549 = vmatpush.bf16.msra.mxu0 %v485
    %1550 = vmatmul.bf16.gmra.mxu0 %v715
    %v1551 = vpop.f32.mrf.mxu0
    %v1552 = vadd.f32 %v1539, %v1551
    %v1553 = vpop.f32.mrf.mxu0
    %1554 = vdwg.mxu0
    %v1556 = vsel %vm155, %v1528, 0
    %1558 = vmatpush.bf16.msra.mxu0 0
    %1559 = vmatpush.bf16.msra.mxu0 0
    %1560 = vmatpush.bf16.msra.mxu0 0
    %1561 = vmatpush.bf16.msra.mxu0 0
    %1562 = vmatpush.bf16.msra.mxu0 0
    %1563 = vmatpush.bf16.msra.mxu0 0
    %1564 = vmatpush.bf16.msra.mxu0 0
    %1565 = vmatpush.bf16.msra.mxu0 %v504
    %1566 = vmatmul.bf16.gmra.mxu0 %v1556
    %v1567 = vpop.f32.mrf.mxu0
    %v1568 = vadd.f32 0.0, %v1567
    %v1569 = vpop.f32.mrf.mxu0
    %v1570 = vadd.f32 0.0, %v1569
    %1571 = vdwg.mxu0
    %1572 = vmatpush.bf16.msra.mxu0 0
    %1573 = vmatpush.bf16.msra.mxu0 0
    %1574 = vmatpush.bf16.msra.mxu0 0
    %1575 = vmatpush.bf16.msra.mxu0 0
    %1576 = vmatpush.bf16.msra.mxu0 0
    %1577 = vmatpush.bf16.msra.mxu0 0
    %1578 = vmatpush.bf16.msra.mxu0 0
    %1579 = vmatpush.bf16.msra.mxu0 %v521
    %1580 = vmatmul.bf16.gmra.mxu0 %v1378
    %v1581 = vpop.f32.mrf.mxu0
    %v1582 = vadd.f32 %v1568, %v1581
    %v1583 = vpop.f32.mrf.mxu0
    %v1584 = vadd.f32 %v1570, %v1583
    %1585 = vdwg.mxu0
    %v1586 = vpack.c.bf16 %v1552, %v1552
    %v1588 = vsel %vm205, %v1586, 0
    %1590 = vmatpush.bf16.msra.mxu0 0
    %1591 = vmatpush.bf16.msra.mxu0 0
    %1592 = vmatpush.bf16.msra.mxu0 0
    %1593 = vmatpush.bf16.msra.mxu0 0
    %1594 = vmatpush.bf16.msra.mxu0 0
    %1595 = vmatpush.bf16.msra.mxu0 0
    %1596 = vmatpush.bf16.msra.mxu0 0
    %1597 = vmatpush.bf16.msra.mxu0 %v1588
    %1598 = vmatmul.bf16.gmra.mxu0 %v203
    %v1599 = vpop.f32.mrf.mxu0
    %v1600 = vadd.f32 0.0, %v1599
    %v1601 = vpop.f32.mrf.mxu0
    %v1602 = vadd.f32 0.0, %v1601
    %1603 = vdwg.mxu0
    %v1604 = vadd.f32 %v1582, %v1600
    %v1605 = vadd.f32 %v1584, %v1602
    %v1606 = vadd.f32 %v1604, %v557
    %v1607 = vadd.f32 %v1605, %v557
    %v1608 = vmax.f32 %v1606, 0.0
    %v1609 = vmax.f32 %v1607, 0.0
    %v1610 = vpack.c.bf16 %v1609, %v1608
    %v1612 = vsel %vm404, %v1610, 0
    %1614 = vmatpush.bf16.msra.mxu0 0
    %1615 = vmatpush.bf16.msra.mxu0 0
    %1616 = vmatpush.bf16.msra.mxu0 0
    %1617 = vmatpush.bf16.msra.mxu0 0
    %1618 = vmatpush.bf16.msra.mxu0 0
    %1619 = vmatpush.bf16.msra.mxu0 0
    %1620 = vmatpush.bf16.msra.mxu0 %v573
    %1621 = vmatpush.bf16.msra.mxu0 %v572
    %1622 = vmatmul.bf16.gmra.mxu0 %v1612
    %v1623 = vpop.f32.mrf.mxu0
    %v1624 = vadd.f32 %v563, %v1623
    %v1625 = vpop.f32.mrf.mxu0
    %v1626 = vadd.f32 %v563, %v1625
    %1627 = vdwg.mxu0
    %v1628 = vpack.c.bf16 %v1626, %v1624
    %1629 = vmatpush.bf16.msra.mxu0 0
    %1630 = vmatpush.bf16.msra.mxu0 0
    %1631 = vmatpush.bf16.msra.mxu0 0
    %1632 = vmatpush.bf16.msra.mxu0 0
    %1633 = vmatpush.bf16.msra.mxu0 0
    %1634 = vmatpush.bf16.msra.mxu0 0
    %1635 = vmatpush.bf16.msra.mxu0 0
    %1636 = vmatpush.bf16.msra.mxu0 %v1628
    %1637 = vmatmul.bf16.gmra.mxu0 %v612
    %v1638 = vpop.f32.mrf.mxu0
    %v1639 = vadd.f32 0.0, %v1638
    %v1640 = vpop.f32.mrf.mxu0
    %1641 = vdwg.mxu0
    %v1642 = vpack.c.bf16 %v1639, %v1639
    %1643 = vmatpush.bf16.msra.mxu0 0
    %1644 = vmatpush.bf16.msra.mxu0 0
    %1645 = vmatpush.bf16.msra.mxu0 0
    %1646 = vmatpush.bf16.msra.mxu0 0
    %1647 = vmatpush.bf16.msra.mxu0 0
    %1648 = vmatpush.bf16.msra.mxu0 0
    %1649 = vmatpush.bf16.msra.mxu0 0
    %1650 = vmatpush.bf16.msra.mxu0 %v629
    %1651 = vmatmul.bf16.gmra.mxu0 %v715
    %v1652 = vpop.f32.mrf.mxu0
    %v1653 = vadd.f32 0.0, %v1652
    %v1654 = vpop.f32.mrf.mxu0
    %1655 = vdwg.mxu0
    %v1657 = vsel %vm155, %v1642, 0
    %1659 = vmatpush.bf16.msra.mxu0 0
    %1660 = vmatpush.bf16.msra.mxu0 0
    %1661 = vmatpush.bf16.msra.mxu0 0
    %1662 = vmatpush.bf16.msra.mxu0 0
    %1663 = vmatpush.bf16.msra.mxu0 0
    %1664 = vmatpush.bf16.msra.mxu0 0
    %1665 = vmatpush.bf16.msra.mxu0 0
    %1666 = vmatpush.bf16.msra.mxu0 %v648
    %1667 = vmatmul.bf16.gmra.mxu0 %v1657
    %v1668 = vpop.f32.mrf.mxu0
    %v1669 = vadd.f32 %v1653, %v1668
    %v1670 = vpop.f32.mrf.mxu0
    %1671 = vdwg.mxu0
    %1672 = vmatpush.bf16.msra.mxu0 0
    %1673 = vmatpush.bf16.msra.mxu0 0
    %1674 = vmatpush.bf16.msra.mxu0 0
    %1675 = vmatpush.bf16.msra.mxu0 0
    %1676 = vmatpush.bf16.msra.mxu0 0
    %1677 = vmatpush.bf16.msra.mxu0 0
    %1678 = vmatpush.bf16.msra.mxu0 0
    %1679 = vmatpush.bf16.msra.mxu0 %v664
    %1680 = vmatmul.bf16.gmra.mxu0 %v1265
    %v1681 = vpop.f32.mrf.mxu0
    %v1682 = vadd.f32 0.0, %v1681
    %v1683 = vpop.f32.mrf.mxu0
    %1684 = vdwg.mxu0
    %v1685 = vadd.f32 %v1669, %v1682
    %v1686 = vadd.f32 %v1685, %v680
    %v1687 = vmax.f32 %v1686, 0.0
    %v1688 = vpack.c.bf16 %v1687, %v1687
    %v1690 = vsel %vm404, %v1688, 0
    %1692 = vmatpush.bf16.msra.mxu0 0
    %1693 = vmatpush.bf16.msra.mxu0 0
    %1694 = vmatpush.bf16.msra.mxu0 0
    %1695 = vmatpush.bf16.msra.mxu0 0
    %1696 = vmatpush.bf16.msra.mxu0 0
    %1697 = vmatpush.bf16.msra.mxu0 0
    %1698 = vmatpush.bf16.msra.mxu0 %v694
    %1699 = vmatpush.bf16.msra.mxu0 %v693
    %1700 = vmatmul.bf16.gmra.mxu0 %v1690
    %v1701 = vpop.f32.mrf.mxu0
    %v1702 = vadd.f32 %v684, %v1701
    %v1703 = vpop.f32.mrf.mxu0
    %1704 = vdwg.mxu0
    %v1705 = vpack.c.bf16 %v1702, %v1702
    %v1707 = vsel %vm155, %v1705, 0
    %1709 = vmatpush.bf16.msra.mxu0 0
    %1710 = vmatpush.bf16.msra.mxu0 0
    %1711 = vmatpush.bf16.msra.mxu0 0
    %1712 = vmatpush.bf16.msra.mxu0 0
    %1713 = vmatpush.bf16.msra.mxu0 0
    %1714 = vmatpush.bf16.msra.mxu0 0
    %1715 = vmatpush.bf16.msra.mxu0 0
    %1716 = vmatpush.bf16.msra.mxu0 %v718
    %1717 = vmatmul.bf16.gmra.mxu0 %v1707
    %v1718 = vpop.f32.mrf.mxu0
    %v1719 = vadd.f32 0.0, %v1718
    %v1720 = vpop.f32.mrf.mxu0
    %1721 = vdwg.mxu0
    %1722 = vmatpush.bf16.msra.mxu0 0
    %1723 = vmatpush.bf16.msra.mxu0 0
    %1724 = vmatpush.bf16.msra.mxu0 0
    %1725 = vmatpush.bf16.msra.mxu0 0
    %1726 = vmatpush.bf16.msra.mxu0 0
    %1727 = vmatpush.bf16.msra.mxu0 0
    %1728 = vmatpush.bf16.msra.mxu0 0
    %1729 = vmatpush.bf16.msra.mxu0 %v734
    %1730 = vmatmul.bf16.gmra.mxu0 %v1265
    %v1731 = vpop.f32.mrf.mxu0
    %v1732 = vadd.f32 %v1719, %v1731
    %v1733 = vpop.f32.mrf.mxu0
    %1734 = vdwg.mxu0
    %v1735 = vpack.c.bf16 %v1732, %v1732
    %v1737 = vsel %vm205, %v1735, 0
    %1739 = vmatpush.bf16.msra.mxu0 0
    %1740 = vmatpush.bf16.msra.mxu0 0
    %1741 = vmatpush.bf16.msra.mxu0 0
    %1742 = vmatpush.bf16.msra.mxu0 0
    %1743 = vmatpush.bf16.msra.mxu0 0
    %1744 = vmatpush.bf16.msra.mxu0 0
    %1745 = vmatpush.bf16.msra.mxu0 0
    %1746 = vmatpush.bf16.msra.mxu0 %v1737
    %1747 = vmatmul.bf16.gmra.mxu0 %v756
    %v1748 = vpop.f32.mrf.mxu0
    %v1749 = vadd.f32 0.0, %v1748
    %v1750 = vpop.f32.mrf.mxu0
    %v1751 = vadd.f32 0.0, %v1750
    %1752 = vdwg.mxu0
    %v1754 = vsel %vm155, %v1143, 0
    %1756 = vmatpush.bf16.msra.mxu0 0
    %1757 = vmatpush.bf16.msra.mxu0 0
    %1758 = vmatpush.bf16.msra.mxu0 0
    %1759 = vmatpush.bf16.msra.mxu0 0
    %1760 = vmatpush.bf16.msra.mxu0 0
    %1761 = vmatpush.bf16.msra.mxu0 0
    %1762 = vmatpush.bf16.msra.mxu0 0
    %1763 = vmatpush.bf16.msra.mxu0 %v784
    %1764 = vmatmul.bf16.gmra.mxu0 %v1754
    %v1765 = vpop.f32.mrf.mxu0
    %v1766 = vadd.f32 0.0, %v1765
    %v1767 = vpop.f32.mrf.mxu0
    %v1768 = vadd.f32 0.0, %v1767
    %1769 = vdwg.mxu0
    %1770 = vmatpush.bf16.msra.mxu0 0
    %1771 = vmatpush.bf16.msra.mxu0 0
    %1772 = vmatpush.bf16.msra.mxu0 0
    %1773 = vmatpush.bf16.msra.mxu0 0
    %1774 = vmatpush.bf16.msra.mxu0 0
    %1775 = vmatpush.bf16.msra.mxu0 0
    %1776 = vmatpush.bf16.msra.mxu0 0
    %1777 = vmatpush.bf16.msra.mxu0 %v801
    %1778 = vmatmul.bf16.gmra.mxu0 %v1754
    %v1779 = vpop.f32.mrf.mxu0
    %v1780 = vadd.f32 %v1749, %v1779
    %v1781 = vpop.f32.mrf.mxu0
    %v1782 = vadd.f32 %v1751, %v1781
    %1783 = vdwg.mxu0
    %v1784 = vpack.c.bf16 %v1782, %v1780
    %v1785 = vpack.c.bf16 %v1768, %v1766
    %1786 = vmatpush.bf16.msra.mxu0 0
    %1787 = vmatpush.bf16.msra.mxu0 0
    %1788 = vmatpush.bf16.msra.mxu0 0
    %1789 = vmatpush.bf16.msra.mxu0 0
    %1790 = vmatpush.bf16.msra.mxu0 0
    %1791 = vmatpush.bf16.msra.mxu0 0
    %1792 = vmatpush.bf16.msra.mxu0 0
    %1793 = vmatpush.bf16.msra.mxu0 %v1785
    %1794 = vmatmul.bf16.gmra.mxu0 %v830
    %v1795 = vpop.f32.mrf.mxu0
    %v1796 = vadd.f32 0.0, %v1795
    %v1797 = vpop.f32.mrf.mxu0
    %v1798 = vadd.f32 0.0, %v1797
    %1799 = vmatmul.bf16.gmra.mxu0 %v833
    %v1800 = vpop.f32.mrf.mxu0
    %v1801 = vadd.f32 0.0, %v1800
    %v1802 = vpop.f32.mrf.mxu0
    %v1803 = vadd.f32 0.0, %v1802
    %1804 = vdwg.mxu0
    %1805 = vmatpush.bf16.msra.mxu0 0
    %1806 = vmatpush.bf16.msra.mxu0 0
    %1807 = vmatpush.bf16.msra.mxu0 0
    %1808 = vmatpush.bf16.msra.mxu0 0
    %1809 = vmatpush.bf16.msra.mxu0 0
    %1810 = vmatpush.bf16.msra.mxu0 0
    %1811 = vmatpush.bf16.msra.mxu0 0
    %1812 = vmatpush.bf16.msra.mxu0 %v1784
    %1813 = vmatmul.bf16.gmra.mxu0 %v865
    %v1814 = vpop.f32.mrf.mxu0
    %v1815 = vadd.f32 %v1796, %v1814
    %v1816 = vpop.f32.mrf.mxu0
    %v1817 = vadd.f32 %v1798, %v1816
    %1818 = vmatmul.bf16.gmra.mxu0 %v868
    %v1819 = vpop.f32.mrf.mxu0
    %v1820 = vadd.f32 %v1801, %v1819
    %v1821 = vpop.f32.mrf.mxu0
    %v1822 = vadd.f32 %v1803, %v1821
    %1823 = vdwg.mxu0
    %v1825 = vsel %vm155, %v980, 0
    %v1828 = vsel %vm155, %v981, 0
    %1830 = vmatpush.bf16.msra.mxu0 0
    %1831 = vmatpush.bf16.msra.mxu0 0
    %1832 = vmatpush.bf16.msra.mxu0 0
    %1833 = vmatpush.bf16.msra.mxu0 0
    %1834 = vmatpush.bf16.msra.mxu0 0
    %1835 = vmatpush.bf16.msra.mxu0 0
    %1836 = vmatpush.bf16.msra.mxu0 0
    %1837 = vmatpush.bf16.msra.mxu0 %v906
    %1838 = vmatmul.bf16.gmra.mxu0 %v1825
    %v1839 = vpop.f32.mrf.mxu0
    %v1840 = vadd.f32 0.0, %v1839
    %v1841 = vpop.f32.mrf.mxu0
    %v1842 = vadd.f32 0.0, %v1841
    %1843 = vmatmul.bf16.gmra.mxu0 %v1828
    %v1844 = vpop.f32.mrf.mxu0
    %v1845 = vadd.f32 0.0, %v1844
    %v1846 = vpop.f32.mrf.mxu0
    %v1847 = vadd.f32 0.0, %v1846
    %1848 = vdwg.mxu0
    %v1849 = vadd.f32 %v1815, %v1840
    %v1850 = vadd.f32 %v1817, %v1842
    %v1851 = vadd.f32 %v1820, %v1845
    %v1852 = vadd.f32 %v1822, %v1847
    %v1853 = vadd.f32 %v1849, %v931
    %v1854 = vadd.f32 %v1850, %v931
    %v1855 = vadd.f32 %v1851, %v931
    %v1856 = vadd.f32 %v1852, %v931
    %v1857 = vmax.f32 %v1853, 0.0
    %v1858 = vmax.f32 %v1854, 0.0
    %v1859 = vmax.f32 %v1855, 0.0
    %v1860 = vmax.f32 %v1856, 0.0
    %v1861 = vpack.c.bf16 %v1858, %v1857
    %v1862 = vpack.c.bf16 %v1860, %v1859
    %v1864 = vsel %vm404, %v1861, 0
    %v1867 = vsel %vm404, %v1862, 0
    %1869 = vmatpush.bf16.msra.mxu0 0
    %1870 = vmatpush.bf16.msra.mxu0 0
    %1871 = vmatpush.bf16.msra.mxu0 0
    %1872 = vmatpush.bf16.msra.mxu0 0
    %1873 = vmatpush.bf16.msra.mxu0 0
    %1874 = vmatpush.bf16.msra.mxu0 0
    %1875 = vmatpush.bf16.msra.mxu0 %v952
    %1876 = vmatpush.bf16.msra.mxu0 %v951
    %1877 = vmatmul.bf16.gmra.mxu0 %v1864
    %v1878 = vpop.f32.mrf.mxu0
    %v1879 = vadd.f32 %v942, %v1878
    %v1880 = vpop.f32.mrf.mxu0
    %v1881 = vadd.f32 %v942, %v1880
    %1882 = vmatmul.bf16.gmra.mxu0 %v1867
    %v1883 = vpop.f32.mrf.mxu0
    %v1884 = vadd.f32 %v942, %v1883
    %v1885 = vpop.f32.mrf.mxu0
    %v1886 = vadd.f32 %v942, %v1885
    %1887 = vdwg.mxu0
    %v1888 = vpack.c.bf16 %v1881, %v1879
    %v1889 = vpack.c.bf16 %v1886, %v1884
    %1890 = vmatpush.bf16.msra.mxu0 0
    %1891 = vmatpush.bf16.msra.mxu0 0
    %1892 = vmatpush.bf16.msra.mxu0 0
    %1893 = vmatpush.bf16.msra.mxu0 0
    %1894 = vmatpush.bf16.msra.mxu0 0
    %1895 = vmatpush.bf16.msra.mxu0 0
    %1896 = vmatpush.bf16.msra.mxu0 %v1889
    %1897 = vmatpush.bf16.msra.mxu0 %v1888
    %1898 = vmatmul.bf16.gmra.mxu0 %v1001
    %v1899 = vpop.f32.mrf.mxu0
    %v1900 = vadd.f32 0.0, %v1899
    %v1901 = vpop.f32.mrf.mxu0
    %v1902 = vadd.f32 0.0, %v1901
    %1903 = vdwg.mxu0
    %v1904 = vpack.c.bf16 %v1902, %v1900
    %1905 = vmatpush.bf16.msra.mxu0 0
    %1906 = vmatpush.bf16.msra.mxu0 0
    %1907 = vmatpush.bf16.msra.mxu0 0
    %1908 = vmatpush.bf16.msra.mxu0 0
    %1909 = vmatpush.bf16.msra.mxu0 0
    %1910 = vmatpush.bf16.msra.mxu0 0
    %1911 = vmatpush.bf16.msra.mxu0 0
    %1912 = vmatpush.bf16.msra.mxu0 %v1019
    %1913 = vmatmul.bf16.gmra.mxu0 %v1707
    %v1914 = vpop.f32.mrf.mxu0
    %v1915 = vadd.f32 0.0, %v1914
    %v1916 = vpop.f32.mrf.mxu0
    %1917 = vdwg.mxu0
    %1918 = vmatpush.bf16.msra.mxu0 0
    %1919 = vmatpush.bf16.msra.mxu0 0
    %1920 = vmatpush.bf16.msra.mxu0 0
    %1921 = vmatpush.bf16.msra.mxu0 0
    %1922 = vmatpush.bf16.msra.mxu0 0
    %1923 = vmatpush.bf16.msra.mxu0 0
    %1924 = vmatpush.bf16.msra.mxu0 0
    %1925 = vmatpush.bf16.msra.mxu0 %v1035
    %1926 = vmatmul.bf16.gmra.mxu0 %v1265
    %v1927 = vpop.f32.mrf.mxu0
    %v1928 = vadd.f32 %v1915, %v1927
    %v1929 = vpop.f32.mrf.mxu0
    %1930 = vdwg.mxu0
    %v1932 = vsel %vm155, %v1904, 0
    %1934 = vmatpush.bf16.msra.mxu0 0
    %1935 = vmatpush.bf16.msra.mxu0 0
    %1936 = vmatpush.bf16.msra.mxu0 0
    %1937 = vmatpush.bf16.msra.mxu0 0
    %1938 = vmatpush.bf16.msra.mxu0 0
    %1939 = vmatpush.bf16.msra.mxu0 0
    %1940 = vmatpush.bf16.msra.mxu0 0
    %1941 = vmatpush.bf16.msra.mxu0 %v1054
    %1942 = vmatmul.bf16.gmra.mxu0 %v1932
    %v1943 = vpop.f32.mrf.mxu0
    %v1944 = vadd.f32 0.0, %v1943
    %v1945 = vpop.f32.mrf.mxu0
    %v1946 = vadd.f32 0.0, %v1945
    %1947 = vdwg.mxu0
    %1948 = vmatpush.bf16.msra.mxu0 0
    %1949 = vmatpush.bf16.msra.mxu0 0
    %1950 = vmatpush.bf16.msra.mxu0 0
    %1951 = vmatpush.bf16.msra.mxu0 0
    %1952 = vmatpush.bf16.msra.mxu0 0
    %1953 = vmatpush.bf16.msra.mxu0 0
    %1954 = vmatpush.bf16.msra.mxu0 0
    %1955 = vmatpush.bf16.msra.mxu0 %v1071
    %1956 = vmatmul.bf16.gmra.mxu0 %v1754
    %v1957 = vpop.f32.mrf.mxu0
    %v1958 = vadd.f32 %v1944, %v1957
    %v1959 = vpop.f32.mrf.mxu0
    %v1960 = vadd.f32 %v1946, %v1959
    %1961 = vdwg.mxu0
    %v1962 = vpack.c.bf16 %v1928, %v1928
    %v1964 = vsel %vm205, %v1962, 0
    %1966 = vmatpush.bf16.msra.mxu0 0
    %1967 = vmatpush.bf16.msra.mxu0 0
    %1968 = vmatpush.bf16.msra.mxu0 0
    %1969 = vmatpush.bf16.msra.mxu0 0
    %1970 = vmatpush.bf16.msra.mxu0 0
    %1971 = vmatpush.bf16.msra.mxu0 0
    %1972 = vmatpush.bf16.msra.mxu0 0
    %1973 = vmatpush.bf16.msra.mxu0 %v1964
    %1974 = vmatmul.bf16.gmra.mxu0 %v756
    %v1975 = vpop.f32.mrf.mxu0
    %v1976 = vadd.f32 0.0, %v1975
    %v1977 = vpop.f32.mrf.mxu0
    %v1978 = vadd.f32 0.0, %v1977
    %1979 = vdwg.mxu0
    %v1980 = vadd.f32 %v1958, %v1976
    %v1981 = vadd.f32 %v1960, %v1978
    %v1982 = vadd.f32 %v1980, %v1107
    %v1983 = vadd.f32 %v1981, %v1107
    %v1984 = vmax.f32 %v1982, 0.0
    %v1985 = vmax.f32 %v1983, 0.0
    %v1986 = vpack.c.bf16 %v1985, %v1984
    %v1988 = vsel %vm404, %v1986, 0
    %1990 = vmatpush.bf16.msra.mxu0 0
    %1991 = vmatpush.bf16.msra.mxu0 0
    %1992 = vmatpush.bf16.msra.mxu0 0
    %1993 = vmatpush.bf16.msra.mxu0 0
    %1994 = vmatpush.bf16.msra.mxu0 0
    %1995 = vmatpush.bf16.msra.mxu0 0
    %1996 = vmatpush.bf16.msra.mxu0 %v1123
    %1997 = vmatpush.bf16.msra.mxu0 %v1122
    %1998 = vmatmul.bf16.gmra.mxu0 %v1988
    %v1999 = vpop.f32.mrf.mxu0
    %v2000 = vadd.f32 %v1113, %v1999
    %v2001 = vpop.f32.mrf.mxu0
    %v2002 = vadd.f32 %v1113, %v2001
    %2003 = vdwg.mxu0
    %v2004 = vpack.c.bf16 %v2002, %v2000
    %2005 = vmatpush.bf16.msra.mxu0 0
    %2006 = vmatpush.bf16.msra.mxu0 0
    %2007 = vmatpush.bf16.msra.mxu0 0
    %2008 = vmatpush.bf16.msra.mxu0 0
    %2009 = vmatpush.bf16.msra.mxu0 0
    %2010 = vmatpush.bf16.msra.mxu0 0
    %2011 = vmatpush.bf16.msra.mxu0 0
    %2012 = vmatpush.bf16.msra.mxu0 %v2004
    %2013 = vmatmul.bf16.gmra.mxu0 %v1162
    %v2014 = vpop.f32.mrf.mxu0
    %v2015 = vadd.f32 0.0, %v2014
    %v2016 = vpop.f32.mrf.mxu0
    %2017 = vdwg.mxu0
    %v2018 = vpack.c.bf16 %v2015, %v2015
    %2019 = vmatpush.bf16.msra.mxu0 0
    %2020 = vmatpush.bf16.msra.mxu0 0
    %2021 = vmatpush.bf16.msra.mxu0 0
    %2022 = vmatpush.bf16.msra.mxu0 0
    %2023 = vmatpush.bf16.msra.mxu0 0
    %2024 = vmatpush.bf16.msra.mxu0 0
    %2025 = vmatpush.bf16.msra.mxu0 0
    %2026 = vmatpush.bf16.msra.mxu0 %v1179
    %2027 = vmatmul.bf16.gmra.mxu0 %v1265
    %v2028 = vpop.f32.mrf.mxu0
    %v2029 = vadd.f32 0.0, %v2028
    %v2030 = vpop.f32.mrf.mxu0
    %2031 = vdwg.mxu0
    %v2033 = vsel %vm155, %v2018, 0
    %2035 = vmatpush.bf16.msra.mxu0 0
    %2036 = vmatpush.bf16.msra.mxu0 0
    %2037 = vmatpush.bf16.msra.mxu0 0
    %2038 = vmatpush.bf16.msra.mxu0 0
    %2039 = vmatpush.bf16.msra.mxu0 0
    %2040 = vmatpush.bf16.msra.mxu0 0
    %2041 = vmatpush.bf16.msra.mxu0 0
    %2042 = vmatpush.bf16.msra.mxu0 %v1198
    %2043 = vmatmul.bf16.gmra.mxu0 %v2033
    %v2044 = vpop.f32.mrf.mxu0
    %v2045 = vadd.f32 %v2029, %v2044
    %v2046 = vpop.f32.mrf.mxu0
    %2047 = vdwg.mxu0
    %2048 = vmatpush.bf16.msra.mxu0 0
    %2049 = vmatpush.bf16.msra.mxu0 0
    %2050 = vmatpush.bf16.msra.mxu0 0
    %2051 = vmatpush.bf16.msra.mxu0 0
    %2052 = vmatpush.bf16.msra.mxu0 0
    %2053 = vmatpush.bf16.msra.mxu0 0
    %2054 = vmatpush.bf16.msra.mxu0 0
    %2055 = vmatpush.bf16.msra.mxu0 %v1214
    %2056 = vmatmul.bf16.gmra.mxu0 %v1707
    %v2057 = vpop.f32.mrf.mxu0
    %v2058 = vadd.f32 0.0, %v2057
    %v2059 = vpop.f32.mrf.mxu0
    %2060 = vdwg.mxu0
    %v2061 = vadd.f32 %v2045, %v2058
    %v2062 = vadd.f32 %v2061, %v1230
    %v2063 = vmax.f32 %v2062, 0.0
    %v2064 = vpack.c.bf16 %v2063, %v2063
    %v2066 = vsel %vm404, %v2064, 0
    %2068 = vmatpush.bf16.msra.mxu0 0
    %2069 = vmatpush.bf16.msra.mxu0 0
    %2070 = vmatpush.bf16.msra.mxu0 0
    %2071 = vmatpush.bf16.msra.mxu0 0
    %2072 = vmatpush.bf16.msra.mxu0 0
    %2073 = vmatpush.bf16.msra.mxu0 0
    %2074 = vmatpush.bf16.msra.mxu0 %v1244
    %2075 = vmatpush.bf16.msra.mxu0 %v1243
    %2076 = vmatmul.bf16.gmra.mxu0 %v2066
    %v2077 = vpop.f32.mrf.mxu0
    %v2078 = vadd.f32 %v1234, %v2077
    %v2079 = vpop.f32.mrf.mxu0
    %2080 = vdwg.mxu0
    %v2081 = vpack.c.bf16 %v2078, %v2078
    %v2083 = vsel %vm155, %v2081, 0
    %2085 = vmatpush.bf16.msra.mxu0 0
    %2086 = vmatpush.bf16.msra.mxu0 0
    %2087 = vmatpush.bf16.msra.mxu0 0
    %2088 = vmatpush.bf16.msra.mxu0 0
    %2089 = vmatpush.bf16.msra.mxu0 0
    %2090 = vmatpush.bf16.msra.mxu0 0
    %2091 = vmatpush.bf16.msra.mxu0 0
    %2092 = vmatpush.bf16.msra.mxu0 %v1268
    %2093 = vmatmul.bf16.gmra.mxu0 %v2083
    %v2094 = vpop.f32.mrf.mxu0
    %v2095 = vadd.f32 0.0, %v2094
    %v2096 = vpop.f32.mrf.mxu0
    %2097 = vdwg.mxu0
    %2098 = vmatpush.bf16.msra.mxu0 0
    %2099 = vmatpush.bf16.msra.mxu0 0
    %2100 = vmatpush.bf16.msra.mxu0 0
    %2101 = vmatpush.bf16.msra.mxu0 0
    %2102 = vmatpush.bf16.msra.mxu0 0
    %2103 = vmatpush.bf16.msra.mxu0 0
    %2104 = vmatpush.bf16.msra.mxu0 0
    %2105 = vmatpush.bf16.msra.mxu0 %v1284
    %2106 = vmatmul.bf16.gmra.mxu0 %v1707
    %v2107 = vpop.f32.mrf.mxu0
    %v2108 = vadd.f32 %v2095, %v2107
    %v2109 = vpop.f32.mrf.mxu0
    %2110 = vdwg.mxu0
    %v2111 = vadd.f32 %v2108, %v1299
    %v2112 = vmax.f32 %v2111, 0.0
    %v2113 = vpack.c.bf16 %v2112, %v2112
    %v2115 = vsel %vm404, %v2113, 0
    %2117 = vmatpush.bf16.msra.mxu0 0
    %2118 = vmatpush.bf16.msra.mxu0 0
    %2119 = vmatpush.bf16.msra.mxu0 0
    %2120 = vmatpush.bf16.msra.mxu0 0
    %2121 = vmatpush.bf16.msra.mxu0 0
    %2122 = vmatpush.bf16.msra.mxu0 0
    %2123 = vmatpush.bf16.msra.mxu0 %v1313
    %2124 = vmatpush.bf16.msra.mxu0 %v1312
    %2125 = vmatmul.bf16.gmra.mxu0 %v2115
    %v2126 = vpop.f32.mrf.mxu0
    %v2127 = vadd.f32 %v1303, %v2126
    %v2128 = vpop.f32.mrf.mxu0
    %2129 = vdwg.mxu0
    %s2130 = scalar_lea.vmem [#allocation5], 2
    %2131 = vst [vmem:[%s2130] sm:$0x3] %v2127
    // Predicated region
    $region62: #{tpu_custom_call.1} parent=1 // pred_check
      _
    $region63: #{tpu_custom_call.1} parent=1 // pred_check_branch
      %2133 = sbr.rel (0) target = $region65
    $region64: #{tpu_custom_call.1} parent=1 // pred_region
      %2135 = vsyncadd [#allocation4], 0
      %s2136 = sshll.u32 [#allocation5], 4
      %s2137 = int_to_ptr.vmem [resolvable:$true] %s2136
      %s2138 = sshll.u32 %s14, 4
      %s2139 = int_to_ptr.hbm [resolvable:$true] %s2138
      %2144 = dma.vmem_to_hbm [thread:$0]  %s2137, 64, %s2139, [#allocation4], 32, 32, 2
    $region65: #{tpu_custom_call.1} parent=1 // pred_fallthru
      _
    // Predicated region
    $region66: #{tpu_custom_call.1} parent=1 // pred_check
      _
    $region67: #{tpu_custom_call.1} parent=1 // pred_check_branch
      %2146 = sbr.rel (0) target = $region69
    $region68: #{tpu_custom_call.1} parent=1 // pred_region
      %2148 = dma.done [#allocation4], 64
    $region69: #{tpu_custom_call.1} parent=1 // pred_fallthru
      _
    %2149 = vsyncpa [#allocation3], 1
    %2150 = vsyncpa [#allocation4], 1

</llo_original>
